<compile_context>
chip_gen: v6e
topology: v6e:2x2x1
jax: 0.10.0
libtpu: 0.0.40
codegen_flags: <defaults>
</compile_context>

<pallas_src>
import jax
import jax.numpy as jnp
import numpy as np
from jax.experimental import pallas as pl
from jax.experimental.pallas import tpu as pltpu


# -----------------------------------------------------------------------------
# Kernel factory: fused embedding+input-proj, LSTM recurrence, output Linear,
# all in a single kernel invocation (everything VMEM-resident).
# -----------------------------------------------------------------------------
def _make_kernel(T, B, H, NL_pad):
    GH = 4 * H
    TB = T * B

    def kernel(tok_ref, emb_proj_ref, whh_ref, b_ref, h0_ref, c0_ref,
               wout_ref, bout_ref, out_ref, xproj_sc):
        # ---- fused embedding lookup + input projection (one MXU matmul) ----
        # one_hot(tokens) @ (emb @ W_ih^T)  ==  emb[tokens] @ W_ih^T
        tok = tok_ref[...]                                           # (TB, 1) int32
        col = jax.lax.broadcasted_iota(jnp.int32, (TB, NL_pad), 1)   # (TB, NL_pad)
        onehot = (tok == col).astype(jnp.float32)                    # exact 0/1 selector
        xproj_sc[...] = (
            jnp.dot(onehot, emb_proj_ref[...],
                    preferred_element_type=jnp.float32)              # (TB, 4H)
            + b_ref[...])                                            # bias folded in once

        whh = whh_ref[...]                                           # (H, 4H), resident

        # ---- serial LSTM recurrence: one packed 128-lane matmul per step ----
        def step(t, carry):
            h, c = carry
            row = pl.multiple_of(t * B, B)                           # sublane-aligned start
            gates = xproj_sc[pl.ds(row, B), :] + jnp.dot(
                h, whh, preferred_element_type=jnp.float32)          # (B, 4H) = one vreg
            # Evaluate transcendentals once over the full packed vreg, then slice.
            sig = jax.nn.sigmoid(gates)
            th = jnp.tanh(gates)
            # PyTorch gate column order: [i | f | g | o]
            i_g = sig[:, 0:H]
            f_g = sig[:, H:2 * H]
            g_g = th[:, 2 * H:3 * H]
            o_g = sig[:, 3 * H:4 * H]
            c_new = f_g * c + i_g * g_g
            h_new = o_g * jnp.tanh(c_new)
            return (h_new, c_new)

        h_T, _ = jax.lax.fori_loop(0, T, step, (h0_ref[...], c0_ref[...]),
                                   unroll=True)

        # ---- output Linear on last hidden state (lane-dense padded O) ------
        out_ref[...] = (jnp.dot(h_T, wout_ref[...],
                                preferred_element_type=jnp.float32)
                        + bout_ref[...]).astype(out_ref.dtype)

    return kernel


def char_nn_forward(tokens, hidden, params):
    """Pallas-backed forward of CharNNClassifier.

    tokens: (T, B) int32 indices
    hidden: (h0, c0) each (1, B, H) f32
    returns: (B, O) f32   == output[-1] in the PyTorch module
    """
    h0, c0 = hidden
    T, B = tokens.shape
    n_letters, _E = params["emb"].shape
    H = h0.shape[-1]
    O = params["w_out"].shape[0]
    GH = 4 * H

    NL_pad = ((n_letters + 7) // 8) * 8          # pad contraction dim to sublane multiple
    O_pad = ((O + 127) // 128) * 128             # lane-dense output slab

    # ---- plain-JAX glue: weight re-layout / folding (done once, off the kernel) ----
    # PyTorch weight_ih_l0 (4H, E), rows ordered [i,f,g,o] -> packed (E, 4H)
    w_ih_packed = params["w_ih"].T.astype(jnp.float32)                       # (E, 4H)
    w_hh_packed = params["w_hh"].T.astype(jnp.float32)                       # (H, 4H)
    # Fold embedding table through the input projection: emb_proj[tok] = emb[tok] @ W_ih^T
    emb_proj = params["emb"].astype(jnp.float32) @ w_ih_packed               # (NL, 4H)
    emb_proj = jnp.pad(emb_proj, ((0, NL_pad - n_letters), (0, 0)))          # (NL_pad, 4H)
    b_packed = (params["b_ih"] + params["b_hh"]).astype(jnp.float32).reshape(1, GH)
    w_out = jnp.pad(params["w_out"].T.astype(jnp.float32),
                    ((0, 0), (0, O_pad - O)))                                # (H, O_pad)
    b_out = jnp.pad(params["b_out"].astype(jnp.float32),
                    (0, O_pad - O)).reshape(1, O_pad)                        # (1, O_pad)

    tok2d = tokens.reshape(T * B, 1).astype(jnp.int32)                       # row = t*B + b

    vmem = lambda: pl.BlockSpec(memory_space=pltpu.MemorySpace.VMEM)

    out_padded = pl.pallas_call(
        _make_kernel(T, B, H, NL_pad),
        out_shape=jax.ShapeDtypeStruct((B, O_pad), jnp.float32),
        in_specs=[vmem(),   # tokens (T*B, 1) int32
                  vmem(),   # emb_proj (NL_pad, 4H)
                  vmem(),   # W_hh packed (H, 4H)
                  vmem(),   # bias (1, 4H)
                  vmem(),   # h0 (B, H)
                  vmem(),   # c0 (B, H)
                  vmem(),   # W_out padded (H, O_pad)
                  vmem()],  # b_out padded (1, O_pad)
        out_specs=vmem(),
        scratch_shapes=[pltpu.VMEM((T * B, GH), jnp.float32)],   # X_proj + bias
    )(tok2d, emb_proj, w_hh_packed, b_packed, h0[0], c0[0], w_out, b_out)

    return out_padded[:, :O]


# -----------------------------------------------------------------------------
# Pure-JAX reference (matches PyTorch nn.LSTM / DPLSTM semantics) for validation.
# -----------------------------------------------------------------------------
def char_nn_reference(tokens, hidden, params):
    h0, c0 = hidden
    H = h0.shape[-1]
    x_emb = params["emb"][tokens].astype(jnp.float32)

    def step(carry, x_t):
        h, c = carry
        gates = (x_t @ params["w_ih"].T + params["b_ih"]
                 + h @ params["w_hh"].T + params["b_hh"])
        i = jax.nn.sigmoid(gates[:, 0:H])
        f = jax.nn.sigmoid(gates[:, H:2 * H])
        g = jnp.tanh(gates[:, 2 * H:3 * H])
        o = jax.nn.sigmoid(gates[:, 3 * H:4 * H])
        c_new = f * c + i * g
        h_new = o * jnp.tanh(c_new)
        return (h_new, c_new), h_new

    (h_T, _), _ = jax.lax.scan(step, (h0[0], c0[0]), x_emb)
    return h_T @ params["w_out"].T + params["b_out"]


# -----------------------------------------------------------------------------
def init_params(key, n_letters, input_size, hidden_size, output_size):
    ks = jax.random.split(key, 8)
    s = 1.0 / np.sqrt(hidden_size)
    return {
        "emb":   jax.random.normal(ks[0], (n_letters, input_size), jnp.float32),
        "w_ih":  jax.random.uniform(ks[1], (4 * hidden_size, input_size), jnp.float32, -s, s),
        "w_hh":  jax.random.uniform(ks[2], (4 * hidden_size, hidden_size), jnp.float32, -s, s),
        "b_ih":  jax.random.uniform(ks[3], (4 * hidden_size,), jnp.float32, -s, s),
        "b_hh":  jax.random.uniform(ks[4], (4 * hidden_size,), jnp.float32, -s, s),
        "w_out": jax.random.uniform(ks[5], (output_size, hidden_size), jnp.float32, -s, s),
        "b_out": jax.random.uniform(ks[6], (output_size,), jnp.float32, -s, s),
    }


if __name__ == "__main__":
    # Small shapes consistent with the module's forward.
    n_letters, input_size, hidden_size, output_size = 26, 64, 32, 16
    seq_len, batch_size = 10, 8   # T*B = 80 (sublane-aligned), 4H = 128 (lane-dense)

    key = jax.random.PRNGKey(0)
    k_param, k_tok = jax.random.split(key)
    params = init_params(k_param, n_letters, input_size, hidden_size, output_size)

    tokens = jax.random.randint(k_tok, (seq_len, batch_size), 0, n_letters, jnp.int32)
    hidden = (jnp.zeros((1, batch_size, hidden_size), jnp.float32),
              jnp.zeros((1, batch_size, hidden_size), jnp.float32))

    out = char_nn_forward(tokens, hidden, params)
    out = jax.block_until_ready(out)

    ref = jax.block_until_ready(char_nn_reference(tokens, hidden, params))
    np.testing.assert_allclose(np.asarray(out), np.asarray(ref), rtol=2e-5, atol=2e-5)

    print("KERNEL_OK")
</pallas_src>

<mosaic_0001>
module attributes {stable_mosaic.version = 11 : i64} {
  func.func @kernel(%arg0: memref<80x1xi32, #tpu.memory_space<vmem>>, %arg1: memref<32x128xf32, #tpu.memory_space<vmem>>, %arg2: memref<32x128xf32, #tpu.memory_space<vmem>>, %arg3: memref<1x128xf32, #tpu.memory_space<vmem>>, %arg4: memref<8x32xf32, #tpu.memory_space<vmem>>, %arg5: memref<8x32xf32, #tpu.memory_space<vmem>>, %arg6: memref<32x128xf32, #tpu.memory_space<vmem>>, %arg7: memref<1x128xf32, #tpu.memory_space<vmem>>, %arg8: memref<8x128xf32, #tpu.memory_space<vmem>>, %arg9: memref<80x128xf32, #tpu.memory_space<vmem>>) attributes {dimension_semantics = [], scalar_prefetch = 0 : i64, scratch_operands = 1 : i64, tpu.core_type = #tpu.core_type<tc>} {
    %c0 = arith.constant 0 : index
    %c0_0 = arith.constant 0 : index
    %0 = vector.load %arg0[%c0, %c0_0] : memref<80x1xi32, #tpu.memory_space<vmem>>, vector<80x1xi32>
    %1 = tpu.iota {dimensions = array<i32: 1>} : vector<80x32xi32>
    %2 = vector.broadcast %0 : vector<80x1xi32> to vector<80x32xi32>
    %3 = arith.cmpi eq, %2, %1 : vector<80x32xi32>
    %4 = arith.extui %3 : vector<80x32xi1> to vector<80x32xi32>
    %5 = arith.sitofp %4 : vector<80x32xi32> to vector<80x32xf32>
    %c0_1 = arith.constant 0 : index
    %c0_2 = arith.constant 0 : index
    %6 = vector.load %arg1[%c0_1, %c0_2] : memref<32x128xf32, #tpu.memory_space<vmem>>, vector<32x128xf32>
    %cst = arith.constant dense<0.000000e+00> : vector<80x128xf32>
    %7 = tpu.matmul %5, %6, %cst {dimension_numbers = #tpu.dot_dimension_numbers<[1], [0], [0], [1], [0, 0, 1, 1], [], []>} : vector<80x32xf32>, vector<32x128xf32>, vector<80x128xf32> -> vector<80x128xf32>
    %c0_3 = arith.constant 0 : index
    %c0_4 = arith.constant 0 : index
    %8 = vector.load %arg3[%c0_3, %c0_4] : memref<1x128xf32, #tpu.memory_space<vmem>>, vector<1x128xf32>
    %9 = vector.broadcast %8 : vector<1x128xf32> to vector<80x128xf32>
    %10 = arith.addf %7, %9 : vector<80x128xf32>
    %c0_5 = arith.constant 0 : index
    %c0_6 = arith.constant 0 : index
    %11 = vector.load %arg9[%c0_5, %c0_6] : memref<80x128xf32, #tpu.memory_space<vmem>>, vector<80x128xf32>
    tpu.vector_store %arg9[%c0_5, %c0_6], %10 {strides = array<i32>} : memref<80x128xf32, #tpu.memory_space<vmem>>, vector<80x128xf32>,
    %c0_7 = arith.constant 0 : index
    %c0_8 = arith.constant 0 : index
    %12 = vector.load %arg2[%c0_7, %c0_8] : memref<32x128xf32, #tpu.memory_space<vmem>>, vector<32x128xf32>
    %c0_9 = arith.constant 0 : index
    %c0_10 = arith.constant 0 : index
    %13 = vector.load %arg4[%c0_9, %c0_10] : memref<8x32xf32, #tpu.memory_space<vmem>>, vector<8x32xf32>
    %c0_11 = arith.constant 0 : index
    %c0_12 = arith.constant 0 : index
    %14 = vector.load %arg5[%c0_11, %c0_12] : memref<8x32xf32, #tpu.memory_space<vmem>>, vector<8x32xf32>
    %c0_i32 = arith.constant 0 : i32
    %c8_i32 = arith.constant 8 : i32
    %15 = arith.muli %c0_i32, %c8_i32 : i32
    %16 = tpu.assume_multiple %15, 8 : i32
    %17 = arith.index_cast %16 : i32 to index
    %c0_13 = arith.constant 0 : index
    %18 = vector.load %arg9[%17, %c0_13] : memref<80x128xf32, #tpu.memory_space<vmem>>, vector<8x128xf32>
    %cst_14 = arith.constant dense<0.000000e+00> : vector<8x128xf32>
    %19 = tpu.matmul %13, %12, %cst_14 {dimension_numbers = #tpu.dot_dimension_numbers<[1], [0], [0], [1], [0, 0, 1, 1], [], []>} : vector<8x32xf32>, vector<32x128xf32>, vector<8x128xf32> -> vector<8x128xf32>
    %20 = arith.addf %18, %19 : vector<8x128xf32>
    %21 = arith.negf %20 : vector<8x128xf32>
    %22 = math.exp %21 : vector<8x128xf32>
    %cst_15 = arith.constant 1.000000e+00 : f32
    %23 = vector.broadcast %cst_15 : f32 to vector<8x128xf32>
    %24 = arith.addf %23, %22 : vector<8x128xf32>
    %25 = arith.divf %23, %24 : vector<8x128xf32>
    %26 = math.tanh %20 : vector<8x128xf32>
    %27 = vector.extract_strided_slice %25 {offsets = [0, 0], sizes = [8, 32], strides = [1, 1]} : vector<8x128xf32> to vector<8x32xf32>
    %28 = vector.extract_strided_slice %25 {offsets = [0, 32], sizes = [8, 32], strides = [1, 1]} : vector<8x128xf32> to vector<8x32xf32>
    %29 = vector.extract_strided_slice %26 {offsets = [0, 64], sizes = [8, 32], strides = [1, 1]} : vector<8x128xf32> to vector<8x32xf32>
    %30 = vector.extract_strided_slice %25 {offsets = [0, 96], sizes = [8, 32], strides = [1, 1]} : vector<8x128xf32> to vector<8x32xf32>
    %31 = arith.mulf %28, %14 : vector<8x32xf32>
    %32 = arith.mulf %27, %29 : vector<8x32xf32>
    %33 = arith.addf %31, %32 : vector<8x32xf32>
    %34 = math.tanh %33 : vector<8x32xf32>
    %35 = arith.mulf %30, %34 : vector<8x32xf32>
    %c1_i32 = arith.constant 1 : i32
    %c8_i32_16 = arith.constant 8 : i32
    %36 = arith.muli %c1_i32, %c8_i32_16 : i32
    %37 = tpu.assume_multiple %36, 8 : i32
    %38 = arith.index_cast %37 : i32 to index
    %c0_17 = arith.constant 0 : index
    %39 = vector.load %arg9[%38, %c0_17] : memref<80x128xf32, #tpu.memory_space<vmem>>, vector<8x128xf32>
    %cst_18 = arith.constant dense<0.000000e+00> : vector<8x128xf32>
    %40 = tpu.matmul %35, %12, %cst_18 {dimension_numbers = #tpu.dot_dimension_numbers<[1], [0], [0], [1], [0, 0, 1, 1], [], []>} : vector<8x32xf32>, vector<32x128xf32>, vector<8x128xf32> -> vector<8x128xf32>
    %41 = arith.addf %39, %40 : vector<8x128xf32>
    %42 = arith.negf %41 : vector<8x128xf32>
    %43 = math.exp %42 : vector<8x128xf32>
    %cst_19 = arith.constant 1.000000e+00 : f32
    %44 = vector.broadcast %cst_19 : f32 to vector<8x128xf32>
    %45 = arith.addf %44, %43 : vector<8x128xf32>
    %46 = arith.divf %44, %45 : vector<8x128xf32>
    %47 = math.tanh %41 : vector<8x128xf32>
    %48 = vector.extract_strided_slice %46 {offsets = [0, 0], sizes = [8, 32], strides = [1, 1]} : vector<8x128xf32> to vector<8x32xf32>
    %49 = vector.extract_strided_slice %46 {offsets = [0, 32], sizes = [8, 32], strides = [1, 1]} : vector<8x128xf32> to vector<8x32xf32>
    %50 = vector.extract_strided_slice %47 {offsets = [0, 64], sizes = [8, 32], strides = [1, 1]} : vector<8x128xf32> to vector<8x32xf32>
    %51 = vector.extract_strided_slice %46 {offsets = [0, 96], sizes = [8, 32], strides = [1, 1]} : vector<8x128xf32> to vector<8x32xf32>
    %52 = arith.mulf %49, %33 : vector<8x32xf32>
    %53 = arith.mulf %48, %50 : vector<8x32xf32>
    %54 = arith.addf %52, %53 : vector<8x32xf32>
    %55 = math.tanh %54 : vector<8x32xf32>
    %56 = arith.mulf %51, %55 : vector<8x32xf32>
    %c2_i32 = arith.constant 2 : i32
    %c8_i32_20 = arith.constant 8 : i32
    %57 = arith.muli %c2_i32, %c8_i32_20 : i32
    %58 = tpu.assume_multiple %57, 8 : i32
    %59 = arith.index_cast %58 : i32 to index
    %c0_21 = arith.constant 0 : index
    %60 = vector.load %arg9[%59, %c0_21] : memref<80x128xf32, #tpu.memory_space<vmem>>, vector<8x128xf32>
    %cst_22 = arith.constant dense<0.000000e+00> : vector<8x128xf32>
    %61 = tpu.matmul %56, %12, %cst_22 {dimension_numbers = #tpu.dot_dimension_numbers<[1], [0], [0], [1], [0, 0, 1, 1], [], []>} : vector<8x32xf32>, vector<32x128xf32>, vector<8x128xf32> -> vector<8x128xf32>
    %62 = arith.addf %60, %61 : vector<8x128xf32>
    %63 = arith.negf %62 : vector<8x128xf32>
    %64 = math.exp %63 : vector<8x128xf32>
    %cst_23 = arith.constant 1.000000e+00 : f32
    %65 = vector.broadcast %cst_23 : f32 to vector<8x128xf32>
    %66 = arith.addf %65, %64 : vector<8x128xf32>
    %67 = arith.divf %65, %66 : vector<8x128xf32>
    %68 = math.tanh %62 : vector<8x128xf32>
    %69 = vector.extract_strided_slice %67 {offsets = [0, 0], sizes = [8, 32], strides = [1, 1]} : vector<8x128xf32> to vector<8x32xf32>
    %70 = vector.extract_strided_slice %67 {offsets = [0, 32], sizes = [8, 32], strides = [1, 1]} : vector<8x128xf32> to vector<8x32xf32>
    %71 = vector.extract_strided_slice %68 {offsets = [0, 64], sizes = [8, 32], strides = [1, 1]} : vector<8x128xf32> to vector<8x32xf32>
    %72 = vector.extract_strided_slice %67 {offsets = [0, 96], sizes = [8, 32], strides = [1, 1]} : vector<8x128xf32> to vector<8x32xf32>
    %73 = arith.mulf %70, %54 : vector<8x32xf32>
    %74 = arith.mulf %69, %71 : vector<8x32xf32>
    %75 = arith.addf %73, %74 : vector<8x32xf32>
    %76 = math.tanh %75 : vector<8x32xf32>
    %77 = arith.mulf %72, %76 : vector<8x32xf32>
    %c3_i32 = arith.constant 3 : i32
    %c8_i32_24 = arith.constant 8 : i32
    %78 = arith.muli %c3_i32, %c8_i32_24 : i32
    %79 = tpu.assume_multiple %78, 8 : i32
    %80 = arith.index_cast %79 : i32 to index
    %c0_25 = arith.constant 0 : index
    %81 = vector.load %arg9[%80, %c0_25] : memref<80x128xf32, #tpu.memory_space<vmem>>, vector<8x128xf32>
    %cst_26 = arith.constant dense<0.000000e+00> : vector<8x128xf32>
    %82 = tpu.matmul %77, %12, %cst_26 {dimension_numbers = #tpu.dot_dimension_numbers<[1], [0], [0], [1], [0, 0, 1, 1], [], []>} : vector<8x32xf32>, vector<32x128xf32>, vector<8x128xf32> -> vector<8x128xf32>
    %83 = arith.addf %81, %82 : vector<8x128xf32>
    %84 = arith.negf %83 : vector<8x128xf32>
    %85 = math.exp %84 : vector<8x128xf32>
    %cst_27 = arith.constant 1.000000e+00 : f32
    %86 = vector.broadcast %cst_27 : f32 to vector<8x128xf32>
    %87 = arith.addf %86, %85 : vector<8x128xf32>
    %88 = arith.divf %86, %87 : vector<8x128xf32>
    %89 = math.tanh %83 : vector<8x128xf32>
    %90 = vector.extract_strided_slice %88 {offsets = [0, 0], sizes = [8, 32], strides = [1, 1]} : vector<8x128xf32> to vector<8x32xf32>
    %91 = vector.extract_strided_slice %88 {offsets = [0, 32], sizes = [8, 32], strides = [1, 1]} : vector<8x128xf32> to vector<8x32xf32>
    %92 = vector.extract_strided_slice %89 {offsets = [0, 64], sizes = [8, 32], strides = [1, 1]} : vector<8x128xf32> to vector<8x32xf32>
    %93 = vector.extract_strided_slice %88 {offsets = [0, 96], sizes = [8, 32], strides = [1, 1]} : vector<8x128xf32> to vector<8x32xf32>
    %94 = arith.mulf %91, %75 : vector<8x32xf32>
    %95 = arith.mulf %90, %92 : vector<8x32xf32>
    %96 = arith.addf %94, %95 : vector<8x32xf32>
    %97 = math.tanh %96 : vector<8x32xf32>
    %98 = arith.mulf %93, %97 : vector<8x32xf32>
    %c4_i32 = arith.constant 4 : i32
    %c8_i32_28 = arith.constant 8 : i32
    %99 = arith.muli %c4_i32, %c8_i32_28 : i32
    %100 = tpu.assume_multiple %99, 8 : i32
    %101 = arith.index_cast %100 : i32 to index
    %c0_29 = arith.constant 0 : index
    %102 = vector.load %arg9[%101, %c0_29] : memref<80x128xf32, #tpu.memory_space<vmem>>, vector<8x128xf32>
    %cst_30 = arith.constant dense<0.000000e+00> : vector<8x128xf32>
    %103 = tpu.matmul %98, %12, %cst_30 {dimension_numbers = #tpu.dot_dimension_numbers<[1], [0], [0], [1], [0, 0, 1, 1], [], []>} : vector<8x32xf32>, vector<32x128xf32>, vector<8x128xf32> -> vector<8x128xf32>
    %104 = arith.addf %102, %103 : vector<8x128xf32>
    %105 = arith.negf %104 : vector<8x128xf32>
    %106 = math.exp %105 : vector<8x128xf32>
    %cst_31 = arith.constant 1.000000e+00 : f32
    %107 = vector.broadcast %cst_31 : f32 to vector<8x128xf32>
    %108 = arith.addf %107, %106 : vector<8x128xf32>
    %109 = arith.divf %107, %108 : vector<8x128xf32>
    %110 = math.tanh %104 : vector<8x128xf32>
    %111 = vector.extract_strided_slice %109 {offsets = [0, 0], sizes = [8, 32], strides = [1, 1]} : vector<8x128xf32> to vector<8x32xf32>
    %112 = vector.extract_strided_slice %109 {offsets = [0, 32], sizes = [8, 32], strides = [1, 1]} : vector<8x128xf32> to vector<8x32xf32>
    %113 = vector.extract_strided_slice %110 {offsets = [0, 64], sizes = [8, 32], strides = [1, 1]} : vector<8x128xf32> to vector<8x32xf32>
    %114 = vector.extract_strided_slice %109 {offsets = [0, 96], sizes = [8, 32], strides = [1, 1]} : vector<8x128xf32> to vector<8x32xf32>
    %115 = arith.mulf %112, %96 : vector<8x32xf32>
    %116 = arith.mulf %111, %113 : vector<8x32xf32>
    %117 = arith.addf %115, %116 : vector<8x32xf32>
    %118 = math.tanh %117 : vector<8x32xf32>
    %119 = arith.mulf %114, %118 : vector<8x32xf32>
    %c5_i32 = arith.constant 5 : i32
    %c8_i32_32 = arith.constant 8 : i32
    %120 = arith.muli %c5_i32, %c8_i32_32 : i32
    %121 = tpu.assume_multiple %120, 8 : i32
    %122 = arith.index_cast %121 : i32 to index
    %c0_33 = arith.constant 0 : index
    %123 = vector.load %arg9[%122, %c0_33] : memref<80x128xf32, #tpu.memory_space<vmem>>, vector<8x128xf32>
    %cst_34 = arith.constant dense<0.000000e+00> : vector<8x128xf32>
    %124 = tpu.matmul %119, %12, %cst_34 {dimension_numbers = #tpu.dot_dimension_numbers<[1], [0], [0], [1], [0, 0, 1, 1], [], []>} : vector<8x32xf32>, vector<32x128xf32>, vector<8x128xf32> -> vector<8x128xf32>
    %125 = arith.addf %123, %124 : vector<8x128xf32>
    %126 = arith.negf %125 : vector<8x128xf32>
    %127 = math.exp %126 : vector<8x128xf32>
    %cst_35 = arith.constant 1.000000e+00 : f32
    %128 = vector.broadcast %cst_35 : f32 to vector<8x128xf32>
    %129 = arith.addf %128, %127 : vector<8x128xf32>
    %130 = arith.divf %128, %129 : vector<8x128xf32>
    %131 = math.tanh %125 : vector<8x128xf32>
    %132 = vector.extract_strided_slice %130 {offsets = [0, 0], sizes = [8, 32], strides = [1, 1]} : vector<8x128xf32> to vector<8x32xf32>
    %133 = vector.extract_strided_slice %130 {offsets = [0, 32], sizes = [8, 32], strides = [1, 1]} : vector<8x128xf32> to vector<8x32xf32>
    %134 = vector.extract_strided_slice %131 {offsets = [0, 64], sizes = [8, 32], strides = [1, 1]} : vector<8x128xf32> to vector<8x32xf32>
    %135 = vector.extract_strided_slice %130 {offsets = [0, 96], sizes = [8, 32], strides = [1, 1]} : vector<8x128xf32> to vector<8x32xf32>
    %136 = arith.mulf %133, %117 : vector<8x32xf32>
    %137 = arith.mulf %132, %134 : vector<8x32xf32>
    %138 = arith.addf %136, %137 : vector<8x32xf32>
    %139 = math.tanh %138 : vector<8x32xf32>
    %140 = arith.mulf %135, %139 : vector<8x32xf32>
    %c6_i32 = arith.constant 6 : i32
    %c8_i32_36 = arith.constant 8 : i32
    %141 = arith.muli %c6_i32, %c8_i32_36 : i32
    %142 = tpu.assume_multiple %141, 8 : i32
    %143 = arith.index_cast %142 : i32 to index
    %c0_37 = arith.constant 0 : index
    %144 = vector.load %arg9[%143, %c0_37] : memref<80x128xf32, #tpu.memory_space<vmem>>, vector<8x128xf32>
    %cst_38 = arith.constant dense<0.000000e+00> : vector<8x128xf32>
    %145 = tpu.matmul %140, %12, %cst_38 {dimension_numbers = #tpu.dot_dimension_numbers<[1], [0], [0], [1], [0, 0, 1, 1], [], []>} : vector<8x32xf32>, vector<32x128xf32>, vector<8x128xf32> -> vector<8x128xf32>
    %146 = arith.addf %144, %145 : vector<8x128xf32>
    %147 = arith.negf %146 : vector<8x128xf32>
    %148 = math.exp %147 : vector<8x128xf32>
    %cst_39 = arith.constant 1.000000e+00 : f32
    %149 = vector.broadcast %cst_39 : f32 to vector<8x128xf32>
    %150 = arith.addf %149, %148 : vector<8x128xf32>
    %151 = arith.divf %149, %150 : vector<8x128xf32>
    %152 = math.tanh %146 : vector<8x128xf32>
    %153 = vector.extract_strided_slice %151 {offsets = [0, 0], sizes = [8, 32], strides = [1, 1]} : vector<8x128xf32> to vector<8x32xf32>
    %154 = vector.extract_strided_slice %151 {offsets = [0, 32], sizes = [8, 32], strides = [1, 1]} : vector<8x128xf32> to vector<8x32xf32>
    %155 = vector.extract_strided_slice %152 {offsets = [0, 64], sizes = [8, 32], strides = [1, 1]} : vector<8x128xf32> to vector<8x32xf32>
    %156 = vector.extract_strided_slice %151 {offsets = [0, 96], sizes = [8, 32], strides = [1, 1]} : vector<8x128xf32> to vector<8x32xf32>
    %157 = arith.mulf %154, %138 : vector<8x32xf32>
    %158 = arith.mulf %153, %155 : vector<8x32xf32>
    %159 = arith.addf %157, %158 : vector<8x32xf32>
    %160 = math.tanh %159 : vector<8x32xf32>
    %161 = arith.mulf %156, %160 : vector<8x32xf32>
    %c7_i32 = arith.constant 7 : i32
    %c8_i32_40 = arith.constant 8 : i32
    %162 = arith.muli %c7_i32, %c8_i32_40 : i32
    %163 = tpu.assume_multiple %162, 8 : i32
    %164 = arith.index_cast %163 : i32 to index
    %c0_41 = arith.constant 0 : index
    %165 = vector.load %arg9[%164, %c0_41] : memref<80x128xf32, #tpu.memory_space<vmem>>, vector<8x128xf32>
    %cst_42 = arith.constant dense<0.000000e+00> : vector<8x128xf32>
    %166 = tpu.matmul %161, %12, %cst_42 {dimension_numbers = #tpu.dot_dimension_numbers<[1], [0], [0], [1], [0, 0, 1, 1], [], []>} : vector<8x32xf32>, vector<32x128xf32>, vector<8x128xf32> -> vector<8x128xf32>
    %167 = arith.addf %165, %166 : vector<8x128xf32>
    %168 = arith.negf %167 : vector<8x128xf32>
    %169 = math.exp %168 : vector<8x128xf32>
    %cst_43 = arith.constant 1.000000e+00 : f32
    %170 = vector.broadcast %cst_43 : f32 to vector<8x128xf32>
    %171 = arith.addf %170, %169 : vector<8x128xf32>
    %172 = arith.divf %170, %171 : vector<8x128xf32>
    %173 = math.tanh %167 : vector<8x128xf32>
    %174 = vector.extract_strided_slice %172 {offsets = [0, 0], sizes = [8, 32], strides = [1, 1]} : vector<8x128xf32> to vector<8x32xf32>
    %175 = vector.extract_strided_slice %172 {offsets = [0, 32], sizes = [8, 32], strides = [1, 1]} : vector<8x128xf32> to vector<8x32xf32>
    %176 = vector.extract_strided_slice %173 {offsets = [0, 64], sizes = [8, 32], strides = [1, 1]} : vector<8x128xf32> to vector<8x32xf32>
    %177 = vector.extract_strided_slice %172 {offsets = [0, 96], sizes = [8, 32], strides = [1, 1]} : vector<8x128xf32> to vector<8x32xf32>
    %178 = arith.mulf %175, %159 : vector<8x32xf32>
    %179 = arith.mulf %174, %176 : vector<8x32xf32>
    %180 = arith.addf %178, %179 : vector<8x32xf32>
    %181 = math.tanh %180 : vector<8x32xf32>
    %182 = arith.mulf %177, %181 : vector<8x32xf32>
    %c8_i32_44 = arith.constant 8 : i32
    %c8_i32_45 = arith.constant 8 : i32
    %183 = arith.muli %c8_i32_44, %c8_i32_45 : i32
    %184 = tpu.assume_multiple %183, 8 : i32
    %185 = arith.index_cast %184 : i32 to index
    %c0_46 = arith.constant 0 : index
    %186 = vector.load %arg9[%185, %c0_46] : memref<80x128xf32, #tpu.memory_space<vmem>>, vector<8x128xf32>
    %cst_47 = arith.constant dense<0.000000e+00> : vector<8x128xf32>
    %187 = tpu.matmul %182, %12, %cst_47 {dimension_numbers = #tpu.dot_dimension_numbers<[1], [0], [0], [1], [0, 0, 1, 1], [], []>} : vector<8x32xf32>, vector<32x128xf32>, vector<8x128xf32> -> vector<8x128xf32>
    %188 = arith.addf %186, %187 : vector<8x128xf32>
    %189 = arith.negf %188 : vector<8x128xf32>
    %190 = math.exp %189 : vector<8x128xf32>
    %cst_48 = arith.constant 1.000000e+00 : f32
    %191 = vector.broadcast %cst_48 : f32 to vector<8x128xf32>
    %192 = arith.addf %191, %190 : vector<8x128xf32>
    %193 = arith.divf %191, %192 : vector<8x128xf32>
    %194 = math.tanh %188 : vector<8x128xf32>
    %195 = vector.extract_strided_slice %193 {offsets = [0, 0], sizes = [8, 32], strides = [1, 1]} : vector<8x128xf32> to vector<8x32xf32>
    %196 = vector.extract_strided_slice %193 {offsets = [0, 32], sizes = [8, 32], strides = [1, 1]} : vector<8x128xf32> to vector<8x32xf32>
    %197 = vector.extract_strided_slice %194 {offsets = [0, 64], sizes = [8, 32], strides = [1, 1]} : vector<8x128xf32> to vector<8x32xf32>
    %198 = vector.extract_strided_slice %193 {offsets = [0, 96], sizes = [8, 32], strides = [1, 1]} : vector<8x128xf32> to vector<8x32xf32>
    %199 = arith.mulf %196, %180 : vector<8x32xf32>
    %200 = arith.mulf %195, %197 : vector<8x32xf32>
    %201 = arith.addf %199, %200 : vector<8x32xf32>
    %202 = math.tanh %201 : vector<8x32xf32>
    %203 = arith.mulf %198, %202 : vector<8x32xf32>
    %c9_i32 = arith.constant 9 : i32
    %c8_i32_49 = arith.constant 8 : i32
    %204 = arith.muli %c9_i32, %c8_i32_49 : i32
    %205 = tpu.assume_multiple %204, 8 : i32
    %206 = arith.index_cast %205 : i32 to index
    %c0_50 = arith.constant 0 : index
    %207 = vector.load %arg9[%206, %c0_50] : memref<80x128xf32, #tpu.memory_space<vmem>>, vector<8x128xf32>
    %cst_51 = arith.constant dense<0.000000e+00> : vector<8x128xf32>
    %208 = tpu.matmul %203, %12, %cst_51 {dimension_numbers = #tpu.dot_dimension_numbers<[1], [0], [0], [1], [0, 0, 1, 1], [], []>} : vector<8x32xf32>, vector<32x128xf32>, vector<8x128xf32> -> vector<8x128xf32>
    %209 = arith.addf %207, %208 : vector<8x128xf32>
    %210 = arith.negf %209 : vector<8x128xf32>
    %211 = math.exp %210 : vector<8x128xf32>
    %cst_52 = arith.constant 1.000000e+00 : f32
    %212 = vector.broadcast %cst_52 : f32 to vector<8x128xf32>
    %213 = arith.addf %212, %211 : vector<8x128xf32>
    %214 = arith.divf %212, %213 : vector<8x128xf32>
    %215 = math.tanh %209 : vector<8x128xf32>
    %216 = vector.extract_strided_slice %214 {offsets = [0, 0], sizes = [8, 32], strides = [1, 1]} : vector<8x128xf32> to vector<8x32xf32>
    %217 = vector.extract_strided_slice %214 {offsets = [0, 32], sizes = [8, 32], strides = [1, 1]} : vector<8x128xf32> to vector<8x32xf32>
    %218 = vector.extract_strided_slice %215 {offsets = [0, 64], sizes = [8, 32], strides = [1, 1]} : vector<8x128xf32> to vector<8x32xf32>
    %219 = vector.extract_strided_slice %214 {offsets = [0, 96], sizes = [8, 32], strides = [1, 1]} : vector<8x128xf32> to vector<8x32xf32>
    %220 = arith.mulf %217, %201 : vector<8x32xf32>
    %221 = arith.mulf %216, %218 : vector<8x32xf32>
    %222 = arith.addf %220, %221 : vector<8x32xf32>
    %223 = math.tanh %222 : vector<8x32xf32>
    %224 = arith.mulf %219, %223 : vector<8x32xf32>
    %c10_i32 = arith.constant 10 : i32
    %c0_53 = arith.constant 0 : index
    %c0_54 = arith.constant 0 : index
    %225 = vector.load %arg6[%c0_53, %c0_54] : memref<32x128xf32, #tpu.memory_space<vmem>>, vector<32x128xf32>
    %cst_55 = arith.constant dense<0.000000e+00> : vector<8x128xf32>
    %226 = tpu.matmul %224, %225, %cst_55 {dimension_numbers = #tpu.dot_dimension_numbers<[1], [0], [0], [1], [0, 0, 1, 1], [], []>} : vector<8x32xf32>, vector<32x128xf32>, vector<8x128xf32> -> vector<8x128xf32>
    %c0_56 = arith.constant 0 : index
    %c0_57 = arith.constant 0 : index
    %227 = vector.load %arg7[%c0_56, %c0_57] : memref<1x128xf32, #tpu.memory_space<vmem>>, vector<1x128xf32>
    %228 = vector.broadcast %227 : vector<1x128xf32> to vector<8x128xf32>
    %229 = arith.addf %226, %228 : vector<8x128xf32>
    %c0_58 = arith.constant 0 : index
    %c0_59 = arith.constant 0 : index
    %230 = vector.load %arg8[%c0_58, %c0_59] : memref<8x128xf32, #tpu.memory_space<vmem>>, vector<8x128xf32>
    tpu.vector_store %arg8[%c0_58, %c0_59], %229 {strides = array<i32>} : memref<8x128xf32, #tpu.memory_space<vmem>>, vector<8x128xf32>,
    return
  }
}

</mosaic_0001>

<llo_original>
// kernel: tpu_custom_call.1
$region0: #{tpu_custom_call.1}
  #allocation0 [shape = 'u32[]', space=smem, size = 0x4, offset = 0x4, fixed_abs, tag = 'smem constant byte address 0x4 - core index']
  #allocation1 [shape = 'u32[144,128]{1,0:T(1,128)}', space=vmem, size = 0x12000, scoped, tag = 'internal scratch']
  #allocation2 [shape = 'f32[80,128]{1,0:T(8,128)}', space=vmem, size = 0xa000, scoped, tag = 'scratch operand']
  %s0 = inlined_call_operand.vmem [shape: s32[80,1], index: 0, kind: input, shape index: {}]
  %s1 = inlined_call_operand.vmem [shape: f32[32,128], index: 1, kind: input, shape index: {}]
  %s2 = inlined_call_operand.vmem [shape: f32[32,128], index: 2, kind: input, shape index: {}]
  %s3 = inlined_call_operand.vmem [shape: f32[1,128], index: 3, kind: input, shape index: {}]
  %s4 = inlined_call_operand.vmem [shape: f32[8,32], index: 4, kind: input, shape index: {}]
  %s5 = inlined_call_operand.vmem [shape: f32[8,32], index: 5, kind: input, shape index: {}]
  %s6 = inlined_call_operand.hbm [shape: f32[32,128], index: 6, kind: input, shape index: {}]
  %s7 = inlined_call_operand.vmem [shape: f32[1,128], index: 7, kind: input, shape index: {}]
  %s8 = inlined_call_operand.hbm [shape: f32[8,128], index: 8, kind: output, shape index: {}]
  %s9 = sld [smem:[#allocation0]]
  $region46: #{tpu_custom_call.1} parent=0
    _
  %s11 = ssub.s32 1, %s9
  %s12 = scalar_select 0, %s11, %s9
  $region1: #{tpu_custom_call.1} parent=0
    #allocation3 [shape = 'u8[16384]{0}', space=vmem, size = 0x4000, scoped, tag = 'input window, operand 6, single buffered']
    #allocation4 [shape = 's32[1]{0}', space=sflag, size = 0x4, scoped, tag = 'scoped memory for tpu_custom_call.1']
    #allocation5 [shape = 's32[1]{0}', space=sflag, size = 0x4, scoped, tag = 'scoped memory for tpu_custom_call.1']
    #allocation6 [shape = 'u8[4096]{0}', space=vmem, size = 0x1000, scoped, tag = 'output window, operand 0, single buffered']
    %13 = vsyncpa [#allocation4], 0
    %14 = vsyncpa [#allocation5], 0
    // Predicated region
    $region2: #{tpu_custom_call.1} parent=1 // pred_check
      _
    $region3: #{tpu_custom_call.1} parent=1 // pred_check_branch
      %16 = sbr.rel (0) target = $region5
    $region4: #{tpu_custom_call.1} parent=1 // pred_region
      _
    $region5: #{tpu_custom_call.1} parent=1 // pred_fallthru
      _
    // Predicated region
    $region6: #{tpu_custom_call.1} parent=1 // pred_check
      _
    $region7: #{tpu_custom_call.1} parent=1 // pred_check_branch
      %18 = sbr.rel (0) target = $region9
    $region8: #{tpu_custom_call.1} parent=1 // pred_region
      _
    $region9: #{tpu_custom_call.1} parent=1 // pred_fallthru
      _
    // Predicated region
    $region10: #{tpu_custom_call.1} parent=1 // pred_check
      _
    $region11: #{tpu_custom_call.1} parent=1 // pred_check_branch
      %20 = sbr.rel (0) target = $region13
    $region12: #{tpu_custom_call.1} parent=1 // pred_region
      _
    $region13: #{tpu_custom_call.1} parent=1 // pred_fallthru
      _
    // Predicated region
    $region14: #{tpu_custom_call.1} parent=1 // pred_check
      _
    $region15: #{tpu_custom_call.1} parent=1 // pred_check_branch
      %22 = sbr.rel (0) target = $region17
    $region16: #{tpu_custom_call.1} parent=1 // pred_region
      _
    $region17: #{tpu_custom_call.1} parent=1 // pred_fallthru
      _
    // Predicated region
    $region18: #{tpu_custom_call.1} parent=1 // pred_check
      _
    $region19: #{tpu_custom_call.1} parent=1 // pred_check_branch
      %24 = sbr.rel (0) target = $region21
    $region20: #{tpu_custom_call.1} parent=1 // pred_region
      _
    $region21: #{tpu_custom_call.1} parent=1 // pred_fallthru
      _
    // Predicated region
    $region22: #{tpu_custom_call.1} parent=1 // pred_check
      _
    $region23: #{tpu_custom_call.1} parent=1 // pred_check_branch
      %26 = sbr.rel (0) target = $region25
    $region24: #{tpu_custom_call.1} parent=1 // pred_region
      _
    $region25: #{tpu_custom_call.1} parent=1 // pred_fallthru
      _
    // Predicated region
    $region26: #{tpu_custom_call.1} parent=1 // pred_check
      _
    $region27: #{tpu_custom_call.1} parent=1 // pred_check_branch
      %28 = sbr.rel (0) target = $region29
    $region28: #{tpu_custom_call.1} parent=1 // pred_region
      %s30 = ssub.s32 512, 512
      %31 = vsyncadd [#allocation4], %s30
      %s32 = sshll.u32 [#allocation3], 4
      %s33 = int_to_ptr.vmem [resolvable:$true] %s32
      %38 = dma.hbm_to_vmem [thread:$0]  %s6, 512, %s33, [#allocation4], 128, 128, 8
    $region29: #{tpu_custom_call.1} parent=1 // pred_fallthru
      _
    // Predicated region
    $region30: #{tpu_custom_call.1} parent=1 // pred_check
      _
    $region31: #{tpu_custom_call.1} parent=1 // pred_check_branch
      %40 = sbr.rel (0) target = $region33
    $region32: #{tpu_custom_call.1} parent=1 // pred_region
      _
    $region33: #{tpu_custom_call.1} parent=1 // pred_fallthru
      _
    // Predicated region
    $region34: #{tpu_custom_call.1} parent=1 // pred_check
      _
    $region35: #{tpu_custom_call.1} parent=1 // pred_check_branch
      %42 = sbr.rel (0) target = $region37
    $region36: #{tpu_custom_call.1} parent=1 // pred_region
      %43 = dma.done [#allocation4], 512
    $region37: #{tpu_custom_call.1} parent=1 // pred_fallthru
      _
    %v44 = vld [vmem:[%s0] sm:$0xff]
    %v45 = vld [vmem:[%s0 + $0x8] sm:$0xff]
    %v46 = vld [vmem:[%s0 + $0x10] sm:$0xff]
    %v47 = vld [vmem:[%s0 + $0x18] sm:$0xff]
    %v48 = vld [vmem:[%s0 + $0x20] sm:$0xff]
    %v49 = vld [vmem:[%s0 + $0x28] sm:$0xff]
    %v50 = vld [vmem:[%s0 + $0x30] sm:$0xff]
    %v51 = vld [vmem:[%s0 + $0x38] sm:$0xff]
    %v52 = vld [vmem:[%s0 + $0x40] sm:$0xff]
    %v53 = vld [vmem:[%s0 + $0x48] sm:$0xff]
    %v54 = vlaneseq
    %v55 = vand.u32 %v54, 127
    %56 = vset.pattern.permute.xlu0 0
    %57 = vperm.xlu0 %56, %v44
    %v58 = vpop.permute.xlu0 %57
    %59 = vset.pattern.permute.xlu0 0
    %60 = vperm.xlu0 %59, %v45
    %v61 = vpop.permute.xlu0 %60
    %62 = vset.pattern.permute.xlu0 0
    %63 = vperm.xlu0 %62, %v46
    %v64 = vpop.permute.xlu0 %63
    %65 = vset.pattern.permute.xlu0 0
    %66 = vperm.xlu0 %65, %v47
    %v67 = vpop.permute.xlu0 %66
    %68 = vset.pattern.permute.xlu0 0
    %69 = vperm.xlu0 %68, %v48
    %v70 = vpop.permute.xlu0 %69
    %71 = vset.pattern.permute.xlu0 0
    %72 = vperm.xlu0 %71, %v49
    %v73 = vpop.permute.xlu0 %72
    %74 = vset.pattern.permute.xlu0 0
    %75 = vperm.xlu0 %74, %v50
    %v76 = vpop.permute.xlu0 %75
    %77 = vset.pattern.permute.xlu0 0
    %78 = vperm.xlu0 %77, %v51
    %v79 = vpop.permute.xlu0 %78
    %80 = vset.pattern.permute.xlu0 0
    %81 = vperm.xlu0 %80, %v52
    %v82 = vpop.permute.xlu0 %81
    %83 = vset.pattern.permute.xlu0 0
    %84 = vperm.xlu0 %83, %v53
    %v85 = vpop.permute.xlu0 %84
    %vm86 = vcmp.eq.s32.totalorder %v58, %v55
    %vm87 = vcmp.eq.s32.totalorder %v61, %v55
    %vm88 = vcmp.eq.s32.totalorder %v64, %v55
    %vm89 = vcmp.eq.s32.totalorder %v67, %v55
    %vm90 = vcmp.eq.s32.totalorder %v70, %v55
    %vm91 = vcmp.eq.s32.totalorder %v73, %v55
    %vm92 = vcmp.eq.s32.totalorder %v76, %v55
    %vm93 = vcmp.eq.s32.totalorder %v79, %v55
    %vm94 = vcmp.eq.s32.totalorder %v82, %v55
    %vm95 = vcmp.eq.s32.totalorder %v85, %v55
    %v96 = vsel %vm86, 1, 0
    %v97 = vsel %vm87, 1, 0
    %v98 = vsel %vm88, 1, 0
    %v99 = vsel %vm89, 1, 0
    %v100 = vsel %vm90, 1, 0
    %v101 = vsel %vm91, 1, 0
    %v102 = vsel %vm92, 1, 0
    %v103 = vsel %vm93, 1, 0
    %v104 = vsel %vm94, 1, 0
    %v105 = vsel %vm95, 1, 0
    %v106 = vcvt.s32.f32 %v96
    %v107 = vcvt.s32.f32 %v97
    %v108 = vcvt.s32.f32 %v98
    %v109 = vcvt.s32.f32 %v99
    %v110 = vcvt.s32.f32 %v100
    %v111 = vcvt.s32.f32 %v101
    %v112 = vcvt.s32.f32 %v102
    %v113 = vcvt.s32.f32 %v103
    %v114 = vcvt.s32.f32 %v104
    %v115 = vcvt.s32.f32 %v105
    %v116 = vld [vmem:[%s1] sm:$0xff]
    %v117 = vld [vmem:[%s1 + $0x8] sm:$0xff]
    %v118 = vld [vmem:[%s1 + $0x10] sm:$0xff]
    %v119 = vld [vmem:[%s1 + $0x18] sm:$0xff]
    %v120 = vld [vmem:[%s3] sm:$0x1]
    %v122 = vlaneseq
    %v123 = vshrl.u32 %v122, 7
    %v124 = vsub.s32 0, %v123
    %v125 = vrot.slane %v120, %v124
    %vm127 = vcmask 261120
    %v129 = vsel %vm127, %v106, 0
    %v132 = vsel %vm127, %v107, 0
    %v135 = vsel %vm127, %v108, 0
    %v138 = vsel %vm127, %v109, 0
    %v141 = vsel %vm127, %v110, 0
    %v144 = vsel %vm127, %v111, 0
    %v147 = vsel %vm127, %v112, 0
    %v150 = vsel %vm127, %v113, 0
    %v153 = vsel %vm127, %v114, 0
    %v156 = vsel %vm127, %v115, 0
    %158 = vmatprep.subr.mxu0 0.0
    %159 = vmatpush1.msra.mxu0 0.0
    %160 = vmatprep.subr.mxu0 0.0
    %161 = vmatpush1.msra.mxu0 0.0
    %162 = vmatprep.subr.mxu0 0.0
    %163 = vmatpush1.msra.mxu0 0.0
    %164 = vmatprep.subr.mxu0 0.0
    %165 = vmatpush1.msra.mxu0 0.0
    %166 = vmatprep.subr.mxu0 0.0
    %167 = vmatpush1.msra.mxu0 0.0
    %168 = vmatprep.subr.mxu0 0.0
    %169 = vmatpush1.msra.mxu0 0.0
    %170 = vmatprep.subr.mxu0 0.0
    %171 = vmatpush1.msra.mxu0 0.0
    %172 = vmatprep.subr.mxu0 0.0
    %173 = vmatpush1.msra.mxu0 0.0
    %174 = vmatprep.subr.mxu0 0.0
    %175 = vmatpush1.msra.mxu0 0.0
    %176 = vmatprep.subr.mxu0 0.0
    %177 = vmatpush1.msra.mxu0 0.0
    %178 = vmatprep.subr.mxu0 0.0
    %179 = vmatpush1.msra.mxu0 0.0
    %180 = vmatprep.subr.mxu0 0.0
    %181 = vmatpush1.msra.mxu0 0.0
    %182 = vmatprep.subr.mxu0 0.0
    %183 = vmatpush1.msra.mxu0 %v119
    %184 = vmatprep.subr.mxu0 0.0
    %185 = vmatpush1.msra.mxu0 %v118
    %186 = vmatprep.subr.mxu0 0.0
    %187 = vmatpush1.msra.mxu0 %v117
    %188 = vmatprep.subr.mxu0 0.0
    %189 = vmatpush1.msra.mxu0 %v116
    %190 = vmatprep.subr.mxu0 0.0
    %191 = vmatpush2.msra.mxu0 0.0
    %192 = vmatprep.subr.mxu0 0.0
    %193 = vmatpush2.msra.mxu0 0.0
    %194 = vmatprep.subr.mxu0 0.0
    %195 = vmatpush2.msra.mxu0 0.0
    %196 = vmatprep.subr.mxu0 0.0
    %197 = vmatpush2.msra.mxu0 0.0
    %198 = vmatprep.subr.mxu0 0.0
    %199 = vmatpush2.msra.mxu0 0.0
    %200 = vmatprep.subr.mxu0 0.0
    %201 = vmatpush2.msra.mxu0 0.0
    %202 = vmatprep.subr.mxu0 0.0
    %203 = vmatpush2.msra.mxu0 0.0
    %204 = vmatprep.subr.mxu0 0.0
    %205 = vmatpush2.msra.mxu0 0.0
    %206 = vmatprep.subr.mxu0 0.0
    %207 = vmatpush2.msra.mxu0 0.0
    %208 = vmatprep.subr.mxu0 0.0
    %209 = vmatpush2.msra.mxu0 0.0
    %210 = vmatprep.subr.mxu0 0.0
    %211 = vmatpush2.msra.mxu0 0.0
    %212 = vmatprep.subr.mxu0 0.0
    %213 = vmatpush2.msra.mxu0 0.0
    %214 = vmatprep.subr.mxu0 0.0
    %215 = vmatpush2.msra.mxu0 0.0
    %216 = vmatprep.subr.mxu0 0.0
    %217 = vmatpush2.msra.mxu0 0.0
    %218 = vmatprep.subr.mxu0 0.0
    %219 = vmatpush2.msra.mxu0 0.0
    %220 = vmatprep.subr.mxu0 0.0
    %221 = vmatpush2.msra.mxu0 0.0
    %222 = vmatprep.mubr.f32.mxu0 0.0
    %223 = vmatmul.mubr.f32.gmra.mxu0 %v129
    %v224 = vpop.f32.mrf.mxu0
    %v225 = vadd.f32 %v125, %v224
    %v226 = vpop.f32.mrf.mxu0
    %227 = vmatprep.mubr.f32.mxu0 0.0
    %228 = vmatmul.mubr.f32.gmra.mxu0 %v132
    %v229 = vpop.f32.mrf.mxu0
    %v230 = vadd.f32 %v125, %v229
    %v231 = vpop.f32.mrf.mxu0
    %232 = vmatprep.mubr.f32.mxu0 0.0
    %233 = vmatmul.mubr.f32.gmra.mxu0 %v135
    %v234 = vpop.f32.mrf.mxu0
    %v235 = vadd.f32 %v125, %v234
    %v236 = vpop.f32.mrf.mxu0
    %237 = vmatprep.mubr.f32.mxu0 0.0
    %238 = vmatmul.mubr.f32.gmra.mxu0 %v138
    %v239 = vpop.f32.mrf.mxu0
    %v240 = vadd.f32 %v125, %v239
    %v241 = vpop.f32.mrf.mxu0
    %242 = vmatprep.mubr.f32.mxu0 0.0
    %243 = vmatmul.mubr.f32.gmra.mxu0 %v141
    %v244 = vpop.f32.mrf.mxu0
    %v245 = vadd.f32 %v125, %v244
    %v246 = vpop.f32.mrf.mxu0
    %247 = vmatprep.mubr.f32.mxu0 0.0
    %248 = vmatmul.mubr.f32.gmra.mxu0 %v144
    %v249 = vpop.f32.mrf.mxu0
    %v250 = vadd.f32 %v125, %v249
    %v251 = vpop.f32.mrf.mxu0
    %252 = vmatprep.mubr.f32.mxu0 0.0
    %253 = vmatmul.mubr.f32.gmra.mxu0 %v147
    %v254 = vpop.f32.mrf.mxu0
    %v255 = vadd.f32 %v125, %v254
    %v256 = vpop.f32.mrf.mxu0
    %257 = vmatprep.mubr.f32.mxu0 0.0
    %258 = vmatmul.mubr.f32.gmra.mxu0 %v150
    %v259 = vpop.f32.mrf.mxu0
    %v260 = vadd.f32 %v125, %v259
    %v261 = vpop.f32.mrf.mxu0
    %262 = vmatprep.mubr.f32.mxu0 0.0
    %263 = vmatmul.mubr.f32.gmra.mxu0 %v153
    %v264 = vpop.f32.mrf.mxu0
    %v265 = vadd.f32 %v125, %v264
    %v266 = vpop.f32.mrf.mxu0
    %267 = vmatprep.mubr.f32.mxu0 0.0
    %268 = vmatmul.mubr.f32.gmra.mxu0 %v156
    %v269 = vpop.f32.mrf.mxu0
    %v270 = vadd.f32 %v125, %v269
    %v271 = vpop.f32.mrf.mxu0
    %272 = vdwg.mxu0
    %273 = vst [vmem:[#allocation2] sm:$0xff] %v225
    %274 = vst [vmem:[#allocation2 + $0x8] sm:$0xff] %v230
    %275 = vst [vmem:[#allocation2 + $0x10] sm:$0xff] %v235
    %276 = vst [vmem:[#allocation2 + $0x18] sm:$0xff] %v240
    %277 = vst [vmem:[#allocation2 + $0x20] sm:$0xff] %v245
    %278 = vst [vmem:[#allocation2 + $0x28] sm:$0xff] %v250
    %279 = vst [vmem:[#allocation2 + $0x30] sm:$0xff] %v255
    %280 = vst [vmem:[#allocation2 + $0x38] sm:$0xff] %v260
    %281 = vst [vmem:[#allocation2 + $0x40] sm:$0xff] %v265
    %282 = vst [vmem:[#allocation2 + $0x48] sm:$0xff] %v270
    %v283 = vld [vmem:[%s2] sm:$0xff]
    %v284 = vld [vmem:[%s2 + $0x8] sm:$0xff]
    %v285 = vld [vmem:[%s2 + $0x10] sm:$0xff]
    %v286 = vld [vmem:[%s2 + $0x18] sm:$0xff]
    %v287 = vld [vmem:[%s4] sm:$0xff]
    %v288 = vld [vmem:[%s5] sm:$0xff]
    %v289 = vld [vmem:[#allocation2] sm:$0xff]
    %v291 = vsel %vm127, %v287, 0
    %293 = vmatprep.subr.mxu0 0.0
    %294 = vmatpush1.msra.mxu0 0.0
    %295 = vmatprep.subr.mxu0 0.0
    %296 = vmatpush1.msra.mxu0 0.0
    %297 = vmatprep.subr.mxu0 0.0
    %298 = vmatpush1.msra.mxu0 0.0
    %299 = vmatprep.subr.mxu0 0.0
    %300 = vmatpush1.msra.mxu0 0.0
    %301 = vmatprep.subr.mxu0 0.0
    %302 = vmatpush1.msra.mxu0 0.0
    %303 = vmatprep.subr.mxu0 0.0
    %304 = vmatpush1.msra.mxu0 0.0
    %305 = vmatprep.subr.mxu0 0.0
    %306 = vmatpush1.msra.mxu0 0.0
    %307 = vmatprep.subr.mxu0 0.0
    %308 = vmatpush1.msra.mxu0 0.0
    %309 = vmatprep.subr.mxu0 0.0
    %310 = vmatpush1.msra.mxu0 0.0
    %311 = vmatprep.subr.mxu0 0.0
    %312 = vmatpush1.msra.mxu0 0.0
    %313 = vmatprep.subr.mxu0 0.0
    %314 = vmatpush1.msra.mxu0 0.0
    %315 = vmatprep.subr.mxu0 0.0
    %316 = vmatpush1.msra.mxu0 0.0
    %317 = vmatprep.subr.mxu0 0.0
    %318 = vmatpush1.msra.mxu0 %v286
    %319 = vmatprep.subr.mxu0 0.0
    %320 = vmatpush1.msra.mxu0 %v285
    %321 = vmatprep.subr.mxu0 0.0
    %322 = vmatpush1.msra.mxu0 %v284
    %323 = vmatprep.subr.mxu0 0.0
    %324 = vmatpush1.msra.mxu0 %v283
    %325 = vmatprep.subr.mxu0 0.0
    %326 = vmatpush2.msra.mxu0 0.0
    %327 = vmatprep.subr.mxu0 0.0
    %328 = vmatpush2.msra.mxu0 0.0
    %329 = vmatprep.subr.mxu0 0.0
    %330 = vmatpush2.msra.mxu0 0.0
    %331 = vmatprep.subr.mxu0 0.0
    %332 = vmatpush2.msra.mxu0 0.0
    %333 = vmatprep.subr.mxu0 0.0
    %334 = vmatpush2.msra.mxu0 0.0
    %335 = vmatprep.subr.mxu0 0.0
    %336 = vmatpush2.msra.mxu0 0.0
    %337 = vmatprep.subr.mxu0 0.0
    %338 = vmatpush2.msra.mxu0 0.0
    %339 = vmatprep.subr.mxu0 0.0
    %340 = vmatpush2.msra.mxu0 0.0
    %341 = vmatprep.subr.mxu0 0.0
    %342 = vmatpush2.msra.mxu0 0.0
    %343 = vmatprep.subr.mxu0 0.0
    %344 = vmatpush2.msra.mxu0 0.0
    %345 = vmatprep.subr.mxu0 0.0
    %346 = vmatpush2.msra.mxu0 0.0
    %347 = vmatprep.subr.mxu0 0.0
    %348 = vmatpush2.msra.mxu0 0.0
    %349 = vmatprep.subr.mxu0 0.0
    %350 = vmatpush2.msra.mxu0 0.0
    %351 = vmatprep.subr.mxu0 0.0
    %352 = vmatpush2.msra.mxu0 0.0
    %353 = vmatprep.subr.mxu0 0.0
    %354 = vmatpush2.msra.mxu0 0.0
    %355 = vmatprep.subr.mxu0 0.0
    %356 = vmatpush2.msra.mxu0 0.0
    %357 = vmatprep.mubr.f32.mxu0 0.0
    %358 = vmatmul.mubr.f32.gmra.mxu0 %v291
    %v359 = vpop.f32.mrf.mxu0
    %v360 = vadd.f32 0.0, %v359
    %v361 = vpop.f32.mrf.mxu0
    %362 = vdwg.mxu0
    %v363 = vadd.f32 %v289, %v360
    %v364 = vxor.u32 %v363, 2147483648
    %v365 = vmul.f32 %v364, 1.442695
    %v366 = vpow.pop %v365
    %v367 = vadd.f32 %v366, 1.0
    %v368 = vrcp.pop %v367
    %v369 = vmul.f32 1.0, %v368
    %v370 = vtanh.pop %v363
    %372 = vrot.lane.b32.xlu0 %v288, 32
    %v373 = vpop.permute.xlu0 %372
    %v375 = vmul.f32 %v369, %v373
    %377 = vrot.lane.b32.xlu0 %v370, 64
    %v378 = vpop.permute.xlu0 %377
    %v380 = vmul.f32 %v369, %v378
    %382 = vrot.lane.b32.xlu0 %v380, 32
    %v383 = vpop.permute.xlu0 %382
    %v385 = vadd.f32 %v375, %v383
    %v386 = vtanh.pop %v385
    %388 = vrot.lane.b32.xlu0 %v386, 64
    %v389 = vpop.permute.xlu0 %388
    %v391 = vmul.f32 %v369, %v389
    %s392 = scalar_lea.vmem [#allocation2], 8
    %v393 = vld [vmem:[%s392] sm:$0xff]
    %395 = vrot.lane.b32.xlu0 %v391, 32
    %v396 = vpop.permute.xlu0 %395
    %v397 = vsel %vm127, %v396, 0
    %399 = vmatprep.subr.mxu0 0.0
    %400 = vmatpush1.msra.mxu0 0.0
    %401 = vmatprep.subr.mxu0 0.0
    %402 = vmatpush1.msra.mxu0 0.0
    %403 = vmatprep.subr.mxu0 0.0
    %404 = vmatpush1.msra.mxu0 0.0
    %405 = vmatprep.subr.mxu0 0.0
    %406 = vmatpush1.msra.mxu0 0.0
    %407 = vmatprep.subr.mxu0 0.0
    %408 = vmatpush1.msra.mxu0 0.0
    %409 = vmatprep.subr.mxu0 0.0
    %410 = vmatpush1.msra.mxu0 0.0
    %411 = vmatprep.subr.mxu0 0.0
    %412 = vmatpush1.msra.mxu0 0.0
    %413 = vmatprep.subr.mxu0 0.0
    %414 = vmatpush1.msra.mxu0 0.0
    %415 = vmatprep.subr.mxu0 0.0
    %416 = vmatpush1.msra.mxu0 0.0
    %417 = vmatprep.subr.mxu0 0.0
    %418 = vmatpush1.msra.mxu0 0.0
    %419 = vmatprep.subr.mxu0 0.0
    %420 = vmatpush1.msra.mxu0 0.0
    %421 = vmatprep.subr.mxu0 0.0
    %422 = vmatpush1.msra.mxu0 0.0
    %423 = vmatprep.subr.mxu0 0.0
    %424 = vmatpush1.msra.mxu0 %v286
    %425 = vmatprep.subr.mxu0 0.0
    %426 = vmatpush1.msra.mxu0 %v285
    %427 = vmatprep.subr.mxu0 0.0
    %428 = vmatpush1.msra.mxu0 %v284
    %429 = vmatprep.subr.mxu0 0.0
    %430 = vmatpush1.msra.mxu0 %v283
    %431 = vmatprep.subr.mxu0 0.0
    %432 = vmatpush2.msra.mxu0 0.0
    %433 = vmatprep.subr.mxu0 0.0
    %434 = vmatpush2.msra.mxu0 0.0
    %435 = vmatprep.subr.mxu0 0.0
    %436 = vmatpush2.msra.mxu0 0.0
    %437 = vmatprep.subr.mxu0 0.0
    %438 = vmatpush2.msra.mxu0 0.0
    %439 = vmatprep.subr.mxu0 0.0
    %440 = vmatpush2.msra.mxu0 0.0
    %441 = vmatprep.subr.mxu0 0.0
    %442 = vmatpush2.msra.mxu0 0.0
    %443 = vmatprep.subr.mxu0 0.0
    %444 = vmatpush2.msra.mxu0 0.0
    %445 = vmatprep.subr.mxu0 0.0
    %446 = vmatpush2.msra.mxu0 0.0
    %447 = vmatprep.subr.mxu0 0.0
    %448 = vmatpush2.msra.mxu0 0.0
    %449 = vmatprep.subr.mxu0 0.0
    %450 = vmatpush2.msra.mxu0 0.0
    %451 = vmatprep.subr.mxu0 0.0
    %452 = vmatpush2.msra.mxu0 0.0
    %453 = vmatprep.subr.mxu0 0.0
    %454 = vmatpush2.msra.mxu0 0.0
    %455 = vmatprep.subr.mxu0 0.0
    %456 = vmatpush2.msra.mxu0 0.0
    %457 = vmatprep.subr.mxu0 0.0
    %458 = vmatpush2.msra.mxu0 0.0
    %459 = vmatprep.subr.mxu0 0.0
    %460 = vmatpush2.msra.mxu0 0.0
    %461 = vmatprep.subr.mxu0 0.0
    %462 = vmatpush2.msra.mxu0 0.0
    %463 = vmatprep.mubr.f32.mxu0 0.0
    %464 = vmatmul.mubr.f32.gmra.mxu0 %v397
    %v465 = vpop.f32.mrf.mxu0
    %v466 = vadd.f32 0.0, %v465
    %v467 = vpop.f32.mrf.mxu0
    %468 = vdwg.mxu0
    %v469 = vadd.f32 %v393, %v466
    %v470 = vxor.u32 %v469, 2147483648
    %v471 = vmul.f32 %v470, 1.442695
    %v472 = vpow.pop %v471
    %v473 = vadd.f32 %v472, 1.0
    %v474 = vrcp.pop %v473
    %v475 = vmul.f32 1.0, %v474
    %v476 = vtanh.pop %v469
    %v477 = vmul.f32 %v475, %v385
    %479 = vrot.lane.b32.xlu0 %v476, 64
    %v480 = vpop.permute.xlu0 %479
    %v482 = vmul.f32 %v475, %v480
    %484 = vrot.lane.b32.xlu0 %v482, 32
    %v485 = vpop.permute.xlu0 %484
    %v487 = vadd.f32 %v477, %v485
    %v488 = vtanh.pop %v487
    %490 = vrot.lane.b32.xlu0 %v488, 64
    %v491 = vpop.permute.xlu0 %490
    %v493 = vmul.f32 %v475, %v491
    %s494 = scalar_lea.vmem [#allocation2], 16
    %v495 = vld [vmem:[%s494] sm:$0xff]
    %497 = vrot.lane.b32.xlu0 %v493, 32
    %v498 = vpop.permute.xlu0 %497
    %v499 = vsel %vm127, %v498, 0
    %501 = vmatprep.subr.mxu0 0.0
    %502 = vmatpush1.msra.mxu0 0.0
    %503 = vmatprep.subr.mxu0 0.0
    %504 = vmatpush1.msra.mxu0 0.0
    %505 = vmatprep.subr.mxu0 0.0
    %506 = vmatpush1.msra.mxu0 0.0
    %507 = vmatprep.subr.mxu0 0.0
    %508 = vmatpush1.msra.mxu0 0.0
    %509 = vmatprep.subr.mxu0 0.0
    %510 = vmatpush1.msra.mxu0 0.0
    %511 = vmatprep.subr.mxu0 0.0
    %512 = vmatpush1.msra.mxu0 0.0
    %513 = vmatprep.subr.mxu0 0.0
    %514 = vmatpush1.msra.mxu0 0.0
    %515 = vmatprep.subr.mxu0 0.0
    %516 = vmatpush1.msra.mxu0 0.0
    %517 = vmatprep.subr.mxu0 0.0
    %518 = vmatpush1.msra.mxu0 0.0
    %519 = vmatprep.subr.mxu0 0.0
    %520 = vmatpush1.msra.mxu0 0.0
    %521 = vmatprep.subr.mxu0 0.0
    %522 = vmatpush1.msra.mxu0 0.0
    %523 = vmatprep.subr.mxu0 0.0
    %524 = vmatpush1.msra.mxu0 0.0
    %525 = vmatprep.subr.mxu0 0.0
    %526 = vmatpush1.msra.mxu0 %v286
    %527 = vmatprep.subr.mxu0 0.0
    %528 = vmatpush1.msra.mxu0 %v285
    %529 = vmatprep.subr.mxu0 0.0
    %530 = vmatpush1.msra.mxu0 %v284
    %531 = vmatprep.subr.mxu0 0.0
    %532 = vmatpush1.msra.mxu0 %v283
    %533 = vmatprep.subr.mxu0 0.0
    %534 = vmatpush2.msra.mxu0 0.0
    %535 = vmatprep.subr.mxu0 0.0
    %536 = vmatpush2.msra.mxu0 0.0
    %537 = vmatprep.subr.mxu0 0.0
    %538 = vmatpush2.msra.mxu0 0.0
    %539 = vmatprep.subr.mxu0 0.0
    %540 = vmatpush2.msra.mxu0 0.0
    %541 = vmatprep.subr.mxu0 0.0
    %542 = vmatpush2.msra.mxu0 0.0
    %543 = vmatprep.subr.mxu0 0.0
    %544 = vmatpush2.msra.mxu0 0.0
    %545 = vmatprep.subr.mxu0 0.0
    %546 = vmatpush2.msra.mxu0 0.0
    %547 = vmatprep.subr.mxu0 0.0
    %548 = vmatpush2.msra.mxu0 0.0
    %549 = vmatprep.subr.mxu0 0.0
    %550 = vmatpush2.msra.mxu0 0.0
    %551 = vmatprep.subr.mxu0 0.0
    %552 = vmatpush2.msra.mxu0 0.0
    %553 = vmatprep.subr.mxu0 0.0
    %554 = vmatpush2.msra.mxu0 0.0
    %555 = vmatprep.subr.mxu0 0.0
    %556 = vmatpush2.msra.mxu0 0.0
    %557 = vmatprep.subr.mxu0 0.0
    %558 = vmatpush2.msra.mxu0 0.0
    %559 = vmatprep.subr.mxu0 0.0
    %560 = vmatpush2.msra.mxu0 0.0
    %561 = vmatprep.subr.mxu0 0.0
    %562 = vmatpush2.msra.mxu0 0.0
    %563 = vmatprep.subr.mxu0 0.0
    %564 = vmatpush2.msra.mxu0 0.0
    %565 = vmatprep.mubr.f32.mxu0 0.0
    %566 = vmatmul.mubr.f32.gmra.mxu0 %v499
    %v567 = vpop.f32.mrf.mxu0
    %v568 = vadd.f32 0.0, %v567
    %v569 = vpop.f32.mrf.mxu0
    %570 = vdwg.mxu0
    %v571 = vadd.f32 %v495, %v568
    %v572 = vxor.u32 %v571, 2147483648
    %v573 = vmul.f32 %v572, 1.442695
    %v574 = vpow.pop %v573
    %v575 = vadd.f32 %v574, 1.0
    %v576 = vrcp.pop %v575
    %v577 = vmul.f32 1.0, %v576
    %v578 = vtanh.pop %v571
    %v579 = vmul.f32 %v577, %v487
    %581 = vrot.lane.b32.xlu0 %v578, 64
    %v582 = vpop.permute.xlu0 %581
    %v584 = vmul.f32 %v577, %v582
    %586 = vrot.lane.b32.xlu0 %v584, 32
    %v587 = vpop.permute.xlu0 %586
    %v589 = vadd.f32 %v579, %v587
    %v590 = vtanh.pop %v589
    %592 = vrot.lane.b32.xlu0 %v590, 64
    %v593 = vpop.permute.xlu0 %592
    %v595 = vmul.f32 %v577, %v593
    %s596 = scalar_lea.vmem [#allocation2], 24
    %v597 = vld [vmem:[%s596] sm:$0xff]
    %599 = vrot.lane.b32.xlu0 %v595, 32
    %v600 = vpop.permute.xlu0 %599
    %v601 = vsel %vm127, %v600, 0
    %603 = vmatprep.subr.mxu0 0.0
    %604 = vmatpush1.msra.mxu0 0.0
    %605 = vmatprep.subr.mxu0 0.0
    %606 = vmatpush1.msra.mxu0 0.0
    %607 = vmatprep.subr.mxu0 0.0
    %608 = vmatpush1.msra.mxu0 0.0
    %609 = vmatprep.subr.mxu0 0.0
    %610 = vmatpush1.msra.mxu0 0.0
    %611 = vmatprep.subr.mxu0 0.0
    %612 = vmatpush1.msra.mxu0 0.0
    %613 = vmatprep.subr.mxu0 0.0
    %614 = vmatpush1.msra.mxu0 0.0
    %615 = vmatprep.subr.mxu0 0.0
    %616 = vmatpush1.msra.mxu0 0.0
    %617 = vmatprep.subr.mxu0 0.0
    %618 = vmatpush1.msra.mxu0 0.0
    %619 = vmatprep.subr.mxu0 0.0
    %620 = vmatpush1.msra.mxu0 0.0
    %621 = vmatprep.subr.mxu0 0.0
    %622 = vmatpush1.msra.mxu0 0.0
    %623 = vmatprep.subr.mxu0 0.0
    %624 = vmatpush1.msra.mxu0 0.0
    %625 = vmatprep.subr.mxu0 0.0
    %626 = vmatpush1.msra.mxu0 0.0
    %627 = vmatprep.subr.mxu0 0.0
    %628 = vmatpush1.msra.mxu0 %v286
    %629 = vmatprep.subr.mxu0 0.0
    %630 = vmatpush1.msra.mxu0 %v285
    %631 = vmatprep.subr.mxu0 0.0
    %632 = vmatpush1.msra.mxu0 %v284
    %633 = vmatprep.subr.mxu0 0.0
    %634 = vmatpush1.msra.mxu0 %v283
    %635 = vmatprep.subr.mxu0 0.0
    %636 = vmatpush2.msra.mxu0 0.0
    %637 = vmatprep.subr.mxu0 0.0
    %638 = vmatpush2.msra.mxu0 0.0
    %639 = vmatprep.subr.mxu0 0.0
    %640 = vmatpush2.msra.mxu0 0.0
    %641 = vmatprep.subr.mxu0 0.0
    %642 = vmatpush2.msra.mxu0 0.0
    %643 = vmatprep.subr.mxu0 0.0
    %644 = vmatpush2.msra.mxu0 0.0
    %645 = vmatprep.subr.mxu0 0.0
    %646 = vmatpush2.msra.mxu0 0.0
    %647 = vmatprep.subr.mxu0 0.0
    %648 = vmatpush2.msra.mxu0 0.0
    %649 = vmatprep.subr.mxu0 0.0
    %650 = vmatpush2.msra.mxu0 0.0
    %651 = vmatprep.subr.mxu0 0.0
    %652 = vmatpush2.msra.mxu0 0.0
    %653 = vmatprep.subr.mxu0 0.0
    %654 = vmatpush2.msra.mxu0 0.0
    %655 = vmatprep.subr.mxu0 0.0
    %656 = vmatpush2.msra.mxu0 0.0
    %657 = vmatprep.subr.mxu0 0.0
    %658 = vmatpush2.msra.mxu0 0.0
    %659 = vmatprep.subr.mxu0 0.0
    %660 = vmatpush2.msra.mxu0 0.0
    %661 = vmatprep.subr.mxu0 0.0
    %662 = vmatpush2.msra.mxu0 0.0
    %663 = vmatprep.subr.mxu0 0.0
    %664 = vmatpush2.msra.mxu0 0.0
    %665 = vmatprep.subr.mxu0 0.0
    %666 = vmatpush2.msra.mxu0 0.0
    %667 = vmatprep.mubr.f32.mxu0 0.0
    %668 = vmatmul.mubr.f32.gmra.mxu0 %v601
    %v669 = vpop.f32.mrf.mxu0
    %v670 = vadd.f32 0.0, %v669
    %v671 = vpop.f32.mrf.mxu0
    %672 = vdwg.mxu0
    %v673 = vadd.f32 %v597, %v670
    %v674 = vxor.u32 %v673, 2147483648
    %v675 = vmul.f32 %v674, 1.442695
    %v676 = vpow.pop %v675
    %v677 = vadd.f32 %v676, 1.0
    %v678 = vrcp.pop %v677
    %v679 = vmul.f32 1.0, %v678
    %v680 = vtanh.pop %v673
    %v681 = vmul.f32 %v679, %v589
    %683 = vrot.lane.b32.xlu0 %v680, 64
    %v684 = vpop.permute.xlu0 %683
    %v686 = vmul.f32 %v679, %v684
    %688 = vrot.lane.b32.xlu0 %v686, 32
    %v689 = vpop.permute.xlu0 %688
    %v691 = vadd.f32 %v681, %v689
    %v692 = vtanh.pop %v691
    %694 = vrot.lane.b32.xlu0 %v692, 64
    %v695 = vpop.permute.xlu0 %694
    %v697 = vmul.f32 %v679, %v695
    %s698 = scalar_lea.vmem [#allocation2], 32
    %v699 = vld [vmem:[%s698] sm:$0xff]
    %701 = vrot.lane.b32.xlu0 %v697, 32
    %v702 = vpop.permute.xlu0 %701
    %v703 = vsel %vm127, %v702, 0
    %705 = vmatprep.subr.mxu0 0.0
    %706 = vmatpush1.msra.mxu0 0.0
    %707 = vmatprep.subr.mxu0 0.0
    %708 = vmatpush1.msra.mxu0 0.0
    %709 = vmatprep.subr.mxu0 0.0
    %710 = vmatpush1.msra.mxu0 0.0
    %711 = vmatprep.subr.mxu0 0.0
    %712 = vmatpush1.msra.mxu0 0.0
    %713 = vmatprep.subr.mxu0 0.0
    %714 = vmatpush1.msra.mxu0 0.0
    %715 = vmatprep.subr.mxu0 0.0
    %716 = vmatpush1.msra.mxu0 0.0
    %717 = vmatprep.subr.mxu0 0.0
    %718 = vmatpush1.msra.mxu0 0.0
    %719 = vmatprep.subr.mxu0 0.0
    %720 = vmatpush1.msra.mxu0 0.0
    %721 = vmatprep.subr.mxu0 0.0
    %722 = vmatpush1.msra.mxu0 0.0
    %723 = vmatprep.subr.mxu0 0.0
    %724 = vmatpush1.msra.mxu0 0.0
    %725 = vmatprep.subr.mxu0 0.0
    %726 = vmatpush1.msra.mxu0 0.0
    %727 = vmatprep.subr.mxu0 0.0
    %728 = vmatpush1.msra.mxu0 0.0
    %729 = vmatprep.subr.mxu0 0.0
    %730 = vmatpush1.msra.mxu0 %v286
    %731 = vmatprep.subr.mxu0 0.0
    %732 = vmatpush1.msra.mxu0 %v285
    %733 = vmatprep.subr.mxu0 0.0
    %734 = vmatpush1.msra.mxu0 %v284
    %735 = vmatprep.subr.mxu0 0.0
    %736 = vmatpush1.msra.mxu0 %v283
    %737 = vmatprep.subr.mxu0 0.0
    %738 = vmatpush2.msra.mxu0 0.0
    %739 = vmatprep.subr.mxu0 0.0
    %740 = vmatpush2.msra.mxu0 0.0
    %741 = vmatprep.subr.mxu0 0.0
    %742 = vmatpush2.msra.mxu0 0.0
    %743 = vmatprep.subr.mxu0 0.0
    %744 = vmatpush2.msra.mxu0 0.0
    %745 = vmatprep.subr.mxu0 0.0
    %746 = vmatpush2.msra.mxu0 0.0
    %747 = vmatprep.subr.mxu0 0.0
    %748 = vmatpush2.msra.mxu0 0.0
    %749 = vmatprep.subr.mxu0 0.0
    %750 = vmatpush2.msra.mxu0 0.0
    %751 = vmatprep.subr.mxu0 0.0
    %752 = vmatpush2.msra.mxu0 0.0
    %753 = vmatprep.subr.mxu0 0.0
    %754 = vmatpush2.msra.mxu0 0.0
    %755 = vmatprep.subr.mxu0 0.0
    %756 = vmatpush2.msra.mxu0 0.0
    %757 = vmatprep.subr.mxu0 0.0
    %758 = vmatpush2.msra.mxu0 0.0
    %759 = vmatprep.subr.mxu0 0.0
    %760 = vmatpush2.msra.mxu0 0.0
    %761 = vmatprep.subr.mxu0 0.0
    %762 = vmatpush2.msra.mxu0 0.0
    %763 = vmatprep.subr.mxu0 0.0
    %764 = vmatpush2.msra.mxu0 0.0
    %765 = vmatprep.subr.mxu0 0.0
    %766 = vmatpush2.msra.mxu0 0.0
    %767 = vmatprep.subr.mxu0 0.0
    %768 = vmatpush2.msra.mxu0 0.0
    %769 = vmatprep.mubr.f32.mxu0 0.0
    %770 = vmatmul.mubr.f32.gmra.mxu0 %v703
    %v771 = vpop.f32.mrf.mxu0
    %v772 = vadd.f32 0.0, %v771
    %v773 = vpop.f32.mrf.mxu0
    %774 = vdwg.mxu0
    %v775 = vadd.f32 %v699, %v772
    %v776 = vxor.u32 %v775, 2147483648
    %v777 = vmul.f32 %v776, 1.442695
    %v778 = vpow.pop %v777
    %v779 = vadd.f32 %v778, 1.0
    %v780 = vrcp.pop %v779
    %v781 = vmul.f32 1.0, %v780
    %v782 = vtanh.pop %v775
    %v783 = vmul.f32 %v781, %v691
    %785 = vrot.lane.b32.xlu0 %v782, 64
    %v786 = vpop.permute.xlu0 %785
    %v788 = vmul.f32 %v781, %v786
    %790 = vrot.lane.b32.xlu0 %v788, 32
    %v791 = vpop.permute.xlu0 %790
    %v793 = vadd.f32 %v783, %v791
    %v794 = vtanh.pop %v793
    %796 = vrot.lane.b32.xlu0 %v794, 64
    %v797 = vpop.permute.xlu0 %796
    %v799 = vmul.f32 %v781, %v797
    %s800 = scalar_lea.vmem [#allocation2], 40
    %v801 = vld [vmem:[%s800] sm:$0xff]
    %803 = vrot.lane.b32.xlu0 %v799, 32
    %v804 = vpop.permute.xlu0 %803
    %v805 = vsel %vm127, %v804, 0
    %807 = vmatprep.subr.mxu0 0.0
    %808 = vmatpush1.msra.mxu0 0.0
    %809 = vmatprep.subr.mxu0 0.0
    %810 = vmatpush1.msra.mxu0 0.0
    %811 = vmatprep.subr.mxu0 0.0
    %812 = vmatpush1.msra.mxu0 0.0
    %813 = vmatprep.subr.mxu0 0.0
    %814 = vmatpush1.msra.mxu0 0.0
    %815 = vmatprep.subr.mxu0 0.0
    %816 = vmatpush1.msra.mxu0 0.0
    %817 = vmatprep.subr.mxu0 0.0
    %818 = vmatpush1.msra.mxu0 0.0
    %819 = vmatprep.subr.mxu0 0.0
    %820 = vmatpush1.msra.mxu0 0.0
    %821 = vmatprep.subr.mxu0 0.0
    %822 = vmatpush1.msra.mxu0 0.0
    %823 = vmatprep.subr.mxu0 0.0
    %824 = vmatpush1.msra.mxu0 0.0
    %825 = vmatprep.subr.mxu0 0.0
    %826 = vmatpush1.msra.mxu0 0.0
    %827 = vmatprep.subr.mxu0 0.0
    %828 = vmatpush1.msra.mxu0 0.0
    %829 = vmatprep.subr.mxu0 0.0
    %830 = vmatpush1.msra.mxu0 0.0
    %831 = vmatprep.subr.mxu0 0.0
    %832 = vmatpush1.msra.mxu0 %v286
    %833 = vmatprep.subr.mxu0 0.0
    %834 = vmatpush1.msra.mxu0 %v285
    %835 = vmatprep.subr.mxu0 0.0
    %836 = vmatpush1.msra.mxu0 %v284
    %837 = vmatprep.subr.mxu0 0.0
    %838 = vmatpush1.msra.mxu0 %v283
    %839 = vmatprep.subr.mxu0 0.0
    %840 = vmatpush2.msra.mxu0 0.0
    %841 = vmatprep.subr.mxu0 0.0
    %842 = vmatpush2.msra.mxu0 0.0
    %843 = vmatprep.subr.mxu0 0.0
    %844 = vmatpush2.msra.mxu0 0.0
    %845 = vmatprep.subr.mxu0 0.0
    %846 = vmatpush2.msra.mxu0 0.0
    %847 = vmatprep.subr.mxu0 0.0
    %848 = vmatpush2.msra.mxu0 0.0
    %849 = vmatprep.subr.mxu0 0.0
    %850 = vmatpush2.msra.mxu0 0.0
    %851 = vmatprep.subr.mxu0 0.0
    %852 = vmatpush2.msra.mxu0 0.0
    %853 = vmatprep.subr.mxu0 0.0
    %854 = vmatpush2.msra.mxu0 0.0
    %855 = vmatprep.subr.mxu0 0.0
    %856 = vmatpush2.msra.mxu0 0.0
    %857 = vmatprep.subr.mxu0 0.0
    %858 = vmatpush2.msra.mxu0 0.0
    %859 = vmatprep.subr.mxu0 0.0
    %860 = vmatpush2.msra.mxu0 0.0
    %861 = vmatprep.subr.mxu0 0.0
    %862 = vmatpush2.msra.mxu0 0.0
    %863 = vmatprep.subr.mxu0 0.0
    %864 = vmatpush2.msra.mxu0 0.0
    %865 = vmatprep.subr.mxu0 0.0
    %866 = vmatpush2.msra.mxu0 0.0
    %867 = vmatprep.subr.mxu0 0.0
    %868 = vmatpush2.msra.mxu0 0.0
    %869 = vmatprep.subr.mxu0 0.0
    %870 = vmatpush2.msra.mxu0 0.0
    %871 = vmatprep.mubr.f32.mxu0 0.0
    %872 = vmatmul.mubr.f32.gmra.mxu0 %v805
    %v873 = vpop.f32.mrf.mxu0
    %v874 = vadd.f32 0.0, %v873
    %v875 = vpop.f32.mrf.mxu0
    %876 = vdwg.mxu0
    %v877 = vadd.f32 %v801, %v874
    %v878 = vxor.u32 %v877, 2147483648
    %v879 = vmul.f32 %v878, 1.442695
    %v880 = vpow.pop %v879
    %v881 = vadd.f32 %v880, 1.0
    %v882 = vrcp.pop %v881
    %v883 = vmul.f32 1.0, %v882
    %v884 = vtanh.pop %v877
    %v885 = vmul.f32 %v883, %v793
    %887 = vrot.lane.b32.xlu0 %v884, 64
    %v888 = vpop.permute.xlu0 %887
    %v890 = vmul.f32 %v883, %v888
    %892 = vrot.lane.b32.xlu0 %v890, 32
    %v893 = vpop.permute.xlu0 %892
    %v895 = vadd.f32 %v885, %v893
    %v896 = vtanh.pop %v895
    %898 = vrot.lane.b32.xlu0 %v896, 64
    %v899 = vpop.permute.xlu0 %898
    %v901 = vmul.f32 %v883, %v899
    %s902 = scalar_lea.vmem [#allocation2], 48
    %v903 = vld [vmem:[%s902] sm:$0xff]
    %905 = vrot.lane.b32.xlu0 %v901, 32
    %v906 = vpop.permute.xlu0 %905
    %v907 = vsel %vm127, %v906, 0
    %909 = vmatprep.subr.mxu0 0.0
    %910 = vmatpush1.msra.mxu0 0.0
    %911 = vmatprep.subr.mxu0 0.0
    %912 = vmatpush1.msra.mxu0 0.0
    %913 = vmatprep.subr.mxu0 0.0
    %914 = vmatpush1.msra.mxu0 0.0
    %915 = vmatprep.subr.mxu0 0.0
    %916 = vmatpush1.msra.mxu0 0.0
    %917 = vmatprep.subr.mxu0 0.0
    %918 = vmatpush1.msra.mxu0 0.0
    %919 = vmatprep.subr.mxu0 0.0
    %920 = vmatpush1.msra.mxu0 0.0
    %921 = vmatprep.subr.mxu0 0.0
    %922 = vmatpush1.msra.mxu0 0.0
    %923 = vmatprep.subr.mxu0 0.0
    %924 = vmatpush1.msra.mxu0 0.0
    %925 = vmatprep.subr.mxu0 0.0
    %926 = vmatpush1.msra.mxu0 0.0
    %927 = vmatprep.subr.mxu0 0.0
    %928 = vmatpush1.msra.mxu0 0.0
    %929 = vmatprep.subr.mxu0 0.0
    %930 = vmatpush1.msra.mxu0 0.0
    %931 = vmatprep.subr.mxu0 0.0
    %932 = vmatpush1.msra.mxu0 0.0
    %933 = vmatprep.subr.mxu0 0.0
    %934 = vmatpush1.msra.mxu0 %v286
    %935 = vmatprep.subr.mxu0 0.0
    %936 = vmatpush1.msra.mxu0 %v285
    %937 = vmatprep.subr.mxu0 0.0
    %938 = vmatpush1.msra.mxu0 %v284
    %939 = vmatprep.subr.mxu0 0.0
    %940 = vmatpush1.msra.mxu0 %v283
    %941 = vmatprep.subr.mxu0 0.0
    %942 = vmatpush2.msra.mxu0 0.0
    %943 = vmatprep.subr.mxu0 0.0
    %944 = vmatpush2.msra.mxu0 0.0
    %945 = vmatprep.subr.mxu0 0.0
    %946 = vmatpush2.msra.mxu0 0.0
    %947 = vmatprep.subr.mxu0 0.0
    %948 = vmatpush2.msra.mxu0 0.0
    %949 = vmatprep.subr.mxu0 0.0
    %950 = vmatpush2.msra.mxu0 0.0
    %951 = vmatprep.subr.mxu0 0.0
    %952 = vmatpush2.msra.mxu0 0.0
    %953 = vmatprep.subr.mxu0 0.0
    %954 = vmatpush2.msra.mxu0 0.0
    %955 = vmatprep.subr.mxu0 0.0
    %956 = vmatpush2.msra.mxu0 0.0
    %957 = vmatprep.subr.mxu0 0.0
    %958 = vmatpush2.msra.mxu0 0.0
    %959 = vmatprep.subr.mxu0 0.0
    %960 = vmatpush2.msra.mxu0 0.0
    %961 = vmatprep.subr.mxu0 0.0
    %962 = vmatpush2.msra.mxu0 0.0
    %963 = vmatprep.subr.mxu0 0.0
    %964 = vmatpush2.msra.mxu0 0.0
    %965 = vmatprep.subr.mxu0 0.0
    %966 = vmatpush2.msra.mxu0 0.0
    %967 = vmatprep.subr.mxu0 0.0
    %968 = vmatpush2.msra.mxu0 0.0
    %969 = vmatprep.subr.mxu0 0.0
    %970 = vmatpush2.msra.mxu0 0.0
    %971 = vmatprep.subr.mxu0 0.0
    %972 = vmatpush2.msra.mxu0 0.0
    %973 = vmatprep.mubr.f32.mxu0 0.0
    %974 = vmatmul.mubr.f32.gmra.mxu0 %v907
    %v975 = vpop.f32.mrf.mxu0
    %v976 = vadd.f32 0.0, %v975
    %v977 = vpop.f32.mrf.mxu0
    %978 = vdwg.mxu0
    %v979 = vadd.f32 %v903, %v976
    %v980 = vxor.u32 %v979, 2147483648
    %v981 = vmul.f32 %v980, 1.442695
    %v982 = vpow.pop %v981
    %v983 = vadd.f32 %v982, 1.0
    %v984 = vrcp.pop %v983
    %v985 = vmul.f32 1.0, %v984
    %v986 = vtanh.pop %v979
    %v987 = vmul.f32 %v985, %v895
    %989 = vrot.lane.b32.xlu0 %v986, 64
    %v990 = vpop.permute.xlu0 %989
    %v992 = vmul.f32 %v985, %v990
    %994 = vrot.lane.b32.xlu0 %v992, 32
    %v995 = vpop.permute.xlu0 %994
    %v997 = vadd.f32 %v987, %v995
    %v998 = vtanh.pop %v997
    %1000 = vrot.lane.b32.xlu0 %v998, 64
    %v1001 = vpop.permute.xlu0 %1000
    %v1003 = vmul.f32 %v985, %v1001
    %s1004 = scalar_lea.vmem [#allocation2], 56
    %v1005 = vld [vmem:[%s1004] sm:$0xff]
    %1007 = vrot.lane.b32.xlu0 %v1003, 32
    %v1008 = vpop.permute.xlu0 %1007
    %v1009 = vsel %vm127, %v1008, 0
    %1011 = vmatprep.subr.mxu0 0.0
    %1012 = vmatpush1.msra.mxu0 0.0
    %1013 = vmatprep.subr.mxu0 0.0
    %1014 = vmatpush1.msra.mxu0 0.0
    %1015 = vmatprep.subr.mxu0 0.0
    %1016 = vmatpush1.msra.mxu0 0.0
    %1017 = vmatprep.subr.mxu0 0.0
    %1018 = vmatpush1.msra.mxu0 0.0
    %1019 = vmatprep.subr.mxu0 0.0
    %1020 = vmatpush1.msra.mxu0 0.0
    %1021 = vmatprep.subr.mxu0 0.0
    %1022 = vmatpush1.msra.mxu0 0.0
    %1023 = vmatprep.subr.mxu0 0.0
    %1024 = vmatpush1.msra.mxu0 0.0
    %1025 = vmatprep.subr.mxu0 0.0
    %1026 = vmatpush1.msra.mxu0 0.0
    %1027 = vmatprep.subr.mxu0 0.0
    %1028 = vmatpush1.msra.mxu0 0.0
    %1029 = vmatprep.subr.mxu0 0.0
    %1030 = vmatpush1.msra.mxu0 0.0
    %1031 = vmatprep.subr.mxu0 0.0
    %1032 = vmatpush1.msra.mxu0 0.0
    %1033 = vmatprep.subr.mxu0 0.0
    %1034 = vmatpush1.msra.mxu0 0.0
    %1035 = vmatprep.subr.mxu0 0.0
    %1036 = vmatpush1.msra.mxu0 %v286
    %1037 = vmatprep.subr.mxu0 0.0
    %1038 = vmatpush1.msra.mxu0 %v285
    %1039 = vmatprep.subr.mxu0 0.0
    %1040 = vmatpush1.msra.mxu0 %v284
    %1041 = vmatprep.subr.mxu0 0.0
    %1042 = vmatpush1.msra.mxu0 %v283
    %1043 = vmatprep.subr.mxu0 0.0
    %1044 = vmatpush2.msra.mxu0 0.0
    %1045 = vmatprep.subr.mxu0 0.0
    %1046 = vmatpush2.msra.mxu0 0.0
    %1047 = vmatprep.subr.mxu0 0.0
    %1048 = vmatpush2.msra.mxu0 0.0
    %1049 = vmatprep.subr.mxu0 0.0
    %1050 = vmatpush2.msra.mxu0 0.0
    %1051 = vmatprep.subr.mxu0 0.0
    %1052 = vmatpush2.msra.mxu0 0.0
    %1053 = vmatprep.subr.mxu0 0.0
    %1054 = vmatpush2.msra.mxu0 0.0
    %1055 = vmatprep.subr.mxu0 0.0
    %1056 = vmatpush2.msra.mxu0 0.0
    %1057 = vmatprep.subr.mxu0 0.0
    %1058 = vmatpush2.msra.mxu0 0.0
    %1059 = vmatprep.subr.mxu0 0.0
    %1060 = vmatpush2.msra.mxu0 0.0
    %1061 = vmatprep.subr.mxu0 0.0
    %1062 = vmatpush2.msra.mxu0 0.0
    %1063 = vmatprep.subr.mxu0 0.0
    %1064 = vmatpush2.msra.mxu0 0.0
    %1065 = vmatprep.subr.mxu0 0.0
    %1066 = vmatpush2.msra.mxu0 0.0
    %1067 = vmatprep.subr.mxu0 0.0
    %1068 = vmatpush2.msra.mxu0 0.0
    %1069 = vmatprep.subr.mxu0 0.0
    %1070 = vmatpush2.msra.mxu0 0.0
    %1071 = vmatprep.subr.mxu0 0.0
    %1072 = vmatpush2.msra.mxu0 0.0
    %1073 = vmatprep.subr.mxu0 0.0
    %1074 = vmatpush2.msra.mxu0 0.0
    %1075 = vmatprep.mubr.f32.mxu0 0.0
    %1076 = vmatmul.mubr.f32.gmra.mxu0 %v1009
    %v1077 = vpop.f32.mrf.mxu0
    %v1078 = vadd.f32 0.0, %v1077
    %v1079 = vpop.f32.mrf.mxu0
    %1080 = vdwg.mxu0
    %v1081 = vadd.f32 %v1005, %v1078
    %v1082 = vxor.u32 %v1081, 2147483648
    %v1083 = vmul.f32 %v1082, 1.442695
    %v1084 = vpow.pop %v1083
    %v1085 = vadd.f32 %v1084, 1.0
    %v1086 = vrcp.pop %v1085
    %v1087 = vmul.f32 1.0, %v1086
    %v1088 = vtanh.pop %v1081
    %v1089 = vmul.f32 %v1087, %v997
    %1091 = vrot.lane.b32.xlu0 %v1088, 64
    %v1092 = vpop.permute.xlu0 %1091
    %v1094 = vmul.f32 %v1087, %v1092
    %1096 = vrot.lane.b32.xlu0 %v1094, 32
    %v1097 = vpop.permute.xlu0 %1096
    %v1099 = vadd.f32 %v1089, %v1097
    %v1100 = vtanh.pop %v1099
    %1102 = vrot.lane.b32.xlu0 %v1100, 64
    %v1103 = vpop.permute.xlu0 %1102
    %v1105 = vmul.f32 %v1087, %v1103
    %s1106 = scalar_lea.vmem [#allocation2], 64
    %v1107 = vld [vmem:[%s1106] sm:$0xff]
    %1109 = vrot.lane.b32.xlu0 %v1105, 32
    %v1110 = vpop.permute.xlu0 %1109
    %v1111 = vsel %vm127, %v1110, 0
    %1113 = vmatprep.subr.mxu0 0.0
    %1114 = vmatpush1.msra.mxu0 0.0
    %1115 = vmatprep.subr.mxu0 0.0
    %1116 = vmatpush1.msra.mxu0 0.0
    %1117 = vmatprep.subr.mxu0 0.0
    %1118 = vmatpush1.msra.mxu0 0.0
    %1119 = vmatprep.subr.mxu0 0.0
    %1120 = vmatpush1.msra.mxu0 0.0
    %1121 = vmatprep.subr.mxu0 0.0
    %1122 = vmatpush1.msra.mxu0 0.0
    %1123 = vmatprep.subr.mxu0 0.0
    %1124 = vmatpush1.msra.mxu0 0.0
    %1125 = vmatprep.subr.mxu0 0.0
    %1126 = vmatpush1.msra.mxu0 0.0
    %1127 = vmatprep.subr.mxu0 0.0
    %1128 = vmatpush1.msra.mxu0 0.0
    %1129 = vmatprep.subr.mxu0 0.0
    %1130 = vmatpush1.msra.mxu0 0.0
    %1131 = vmatprep.subr.mxu0 0.0
    %1132 = vmatpush1.msra.mxu0 0.0
    %1133 = vmatprep.subr.mxu0 0.0
    %1134 = vmatpush1.msra.mxu0 0.0
    %1135 = vmatprep.subr.mxu0 0.0
    %1136 = vmatpush1.msra.mxu0 0.0
    %1137 = vmatprep.subr.mxu0 0.0
    %1138 = vmatpush1.msra.mxu0 %v286
    %1139 = vmatprep.subr.mxu0 0.0
    %1140 = vmatpush1.msra.mxu0 %v285
    %1141 = vmatprep.subr.mxu0 0.0
    %1142 = vmatpush1.msra.mxu0 %v284
    %1143 = vmatprep.subr.mxu0 0.0
    %1144 = vmatpush1.msra.mxu0 %v283
    %1145 = vmatprep.subr.mxu0 0.0
    %1146 = vmatpush2.msra.mxu0 0.0
    %1147 = vmatprep.subr.mxu0 0.0
    %1148 = vmatpush2.msra.mxu0 0.0
    %1149 = vmatprep.subr.mxu0 0.0
    %1150 = vmatpush2.msra.mxu0 0.0
    %1151 = vmatprep.subr.mxu0 0.0
    %1152 = vmatpush2.msra.mxu0 0.0
    %1153 = vmatprep.subr.mxu0 0.0
    %1154 = vmatpush2.msra.mxu0 0.0
    %1155 = vmatprep.subr.mxu0 0.0
    %1156 = vmatpush2.msra.mxu0 0.0
    %1157 = vmatprep.subr.mxu0 0.0
    %1158 = vmatpush2.msra.mxu0 0.0
    %1159 = vmatprep.subr.mxu0 0.0
    %1160 = vmatpush2.msra.mxu0 0.0
    %1161 = vmatprep.subr.mxu0 0.0
    %1162 = vmatpush2.msra.mxu0 0.0
    %1163 = vmatprep.subr.mxu0 0.0
    %1164 = vmatpush2.msra.mxu0 0.0
    %1165 = vmatprep.subr.mxu0 0.0
    %1166 = vmatpush2.msra.mxu0 0.0
    %1167 = vmatprep.subr.mxu0 0.0
    %1168 = vmatpush2.msra.mxu0 0.0
    %1169 = vmatprep.subr.mxu0 0.0
    %1170 = vmatpush2.msra.mxu0 0.0
    %1171 = vmatprep.subr.mxu0 0.0
    %1172 = vmatpush2.msra.mxu0 0.0
    %1173 = vmatprep.subr.mxu0 0.0
    %1174 = vmatpush2.msra.mxu0 0.0
    %1175 = vmatprep.subr.mxu0 0.0
    %1176 = vmatpush2.msra.mxu0 0.0
    %1177 = vmatprep.mubr.f32.mxu0 0.0
    %1178 = vmatmul.mubr.f32.gmra.mxu0 %v1111
    %v1179 = vpop.f32.mrf.mxu0
    %v1180 = vadd.f32 0.0, %v1179
    %v1181 = vpop.f32.mrf.mxu0
    %1182 = vdwg.mxu0
    %v1183 = vadd.f32 %v1107, %v1180
    %v1184 = vxor.u32 %v1183, 2147483648
    %v1185 = vmul.f32 %v1184, 1.442695
    %v1186 = vpow.pop %v1185
    %v1187 = vadd.f32 %v1186, 1.0
    %v1188 = vrcp.pop %v1187
    %v1189 = vmul.f32 1.0, %v1188
    %v1190 = vtanh.pop %v1183
    %v1191 = vmul.f32 %v1189, %v1099
    %1193 = vrot.lane.b32.xlu0 %v1190, 64
    %v1194 = vpop.permute.xlu0 %1193
    %v1196 = vmul.f32 %v1189, %v1194
    %1198 = vrot.lane.b32.xlu0 %v1196, 32
    %v1199 = vpop.permute.xlu0 %1198
    %v1201 = vadd.f32 %v1191, %v1199
    %v1202 = vtanh.pop %v1201
    %1204 = vrot.lane.b32.xlu0 %v1202, 64
    %v1205 = vpop.permute.xlu0 %1204
    %v1207 = vmul.f32 %v1189, %v1205
    %s1208 = scalar_lea.vmem [#allocation2], 72
    %v1209 = vld [vmem:[%s1208] sm:$0xff]
    %1211 = vrot.lane.b32.xlu0 %v1207, 32
    %v1212 = vpop.permute.xlu0 %1211
    %v1213 = vsel %vm127, %v1212, 0
    %1215 = vmatprep.subr.mxu0 0.0
    %1216 = vmatpush1.msra.mxu0 0.0
    %1217 = vmatprep.subr.mxu0 0.0
    %1218 = vmatpush1.msra.mxu0 0.0
    %1219 = vmatprep.subr.mxu0 0.0
    %1220 = vmatpush1.msra.mxu0 0.0
    %1221 = vmatprep.subr.mxu0 0.0
    %1222 = vmatpush1.msra.mxu0 0.0
    %1223 = vmatprep.subr.mxu0 0.0
    %1224 = vmatpush1.msra.mxu0 0.0
    %1225 = vmatprep.subr.mxu0 0.0
    %1226 = vmatpush1.msra.mxu0 0.0
    %1227 = vmatprep.subr.mxu0 0.0
    %1228 = vmatpush1.msra.mxu0 0.0
    %1229 = vmatprep.subr.mxu0 0.0
    %1230 = vmatpush1.msra.mxu0 0.0
    %1231 = vmatprep.subr.mxu0 0.0
    %1232 = vmatpush1.msra.mxu0 0.0
    %1233 = vmatprep.subr.mxu0 0.0
    %1234 = vmatpush1.msra.mxu0 0.0
    %1235 = vmatprep.subr.mxu0 0.0
    %1236 = vmatpush1.msra.mxu0 0.0
    %1237 = vmatprep.subr.mxu0 0.0
    %1238 = vmatpush1.msra.mxu0 0.0
    %1239 = vmatprep.subr.mxu0 0.0
    %1240 = vmatpush1.msra.mxu0 %v286
    %1241 = vmatprep.subr.mxu0 0.0
    %1242 = vmatpush1.msra.mxu0 %v285
    %1243 = vmatprep.subr.mxu0 0.0
    %1244 = vmatpush1.msra.mxu0 %v284
    %1245 = vmatprep.subr.mxu0 0.0
    %1246 = vmatpush1.msra.mxu0 %v283
    %1247 = vmatprep.subr.mxu0 0.0
    %1248 = vmatpush2.msra.mxu0 0.0
    %1249 = vmatprep.subr.mxu0 0.0
    %1250 = vmatpush2.msra.mxu0 0.0
    %1251 = vmatprep.subr.mxu0 0.0
    %1252 = vmatpush2.msra.mxu0 0.0
    %1253 = vmatprep.subr.mxu0 0.0
    %1254 = vmatpush2.msra.mxu0 0.0
    %1255 = vmatprep.subr.mxu0 0.0
    %1256 = vmatpush2.msra.mxu0 0.0
    %1257 = vmatprep.subr.mxu0 0.0
    %1258 = vmatpush2.msra.mxu0 0.0
    %1259 = vmatprep.subr.mxu0 0.0
    %1260 = vmatpush2.msra.mxu0 0.0
    %1261 = vmatprep.subr.mxu0 0.0
    %1262 = vmatpush2.msra.mxu0 0.0
    %1263 = vmatprep.subr.mxu0 0.0
    %1264 = vmatpush2.msra.mxu0 0.0
    %1265 = vmatprep.subr.mxu0 0.0
    %1266 = vmatpush2.msra.mxu0 0.0
    %1267 = vmatprep.subr.mxu0 0.0
    %1268 = vmatpush2.msra.mxu0 0.0
    %1269 = vmatprep.subr.mxu0 0.0
    %1270 = vmatpush2.msra.mxu0 0.0
    %1271 = vmatprep.subr.mxu0 0.0
    %1272 = vmatpush2.msra.mxu0 0.0
    %1273 = vmatprep.subr.mxu0 0.0
    %1274 = vmatpush2.msra.mxu0 0.0
    %1275 = vmatprep.subr.mxu0 0.0
    %1276 = vmatpush2.msra.mxu0 0.0
    %1277 = vmatprep.subr.mxu0 0.0
    %1278 = vmatpush2.msra.mxu0 0.0
    %1279 = vmatprep.mubr.f32.mxu0 0.0
    %1280 = vmatmul.mubr.f32.gmra.mxu0 %v1213
    %v1281 = vpop.f32.mrf.mxu0
    %v1282 = vadd.f32 0.0, %v1281
    %v1283 = vpop.f32.mrf.mxu0
    %1284 = vdwg.mxu0
    %v1285 = vadd.f32 %v1209, %v1282
    %v1286 = vxor.u32 %v1285, 2147483648
    %v1287 = vmul.f32 %v1286, 1.442695
    %v1288 = vpow.pop %v1287
    %v1289 = vadd.f32 %v1288, 1.0
    %v1290 = vrcp.pop %v1289
    %v1291 = vmul.f32 1.0, %v1290
    %v1292 = vtanh.pop %v1285
    %v1293 = vmul.f32 %v1291, %v1201
    %1295 = vrot.lane.b32.xlu0 %v1292, 64
    %v1296 = vpop.permute.xlu0 %1295
    %v1298 = vmul.f32 %v1291, %v1296
    %1300 = vrot.lane.b32.xlu0 %v1298, 32
    %v1301 = vpop.permute.xlu0 %1300
    %v1303 = vadd.f32 %v1293, %v1301
    %v1304 = vtanh.pop %v1303
    %1306 = vrot.lane.b32.xlu0 %v1304, 64
    %v1307 = vpop.permute.xlu0 %1306
    %v1309 = vmul.f32 %v1291, %v1307
    %v1310 = vld [vmem:[#allocation3] sm:$0xff]
    %v1311 = vld [vmem:[#allocation3 + $0x8] sm:$0xff]
    %v1312 = vld [vmem:[#allocation3 + $0x10] sm:$0xff]
    %v1313 = vld [vmem:[#allocation3 + $0x18] sm:$0xff]
    %v1314 = vld [vmem:[%s7] sm:$0x1]
    %v1316 = vlaneseq
    %v1317 = vshrl.u32 %v1316, 7
    %v1318 = vsub.s32 0, %v1317
    %v1319 = vrot.slane %v1314, %v1318
    %1322 = vrot.lane.b32.xlu0 %v1309, 32
    %v1323 = vpop.permute.xlu0 %1322
    %v1324 = vsel %vm127, %v1323, 0
    %1326 = vmatprep.subr.mxu0 0.0
    %1327 = vmatpush1.msra.mxu0 0.0
    %1328 = vmatprep.subr.mxu0 0.0
    %1329 = vmatpush1.msra.mxu0 0.0
    %1330 = vmatprep.subr.mxu0 0.0
    %1331 = vmatpush1.msra.mxu0 0.0
    %1332 = vmatprep.subr.mxu0 0.0
    %1333 = vmatpush1.msra.mxu0 0.0
    %1334 = vmatprep.subr.mxu0 0.0
    %1335 = vmatpush1.msra.mxu0 0.0
    %1336 = vmatprep.subr.mxu0 0.0
    %1337 = vmatpush1.msra.mxu0 0.0
    %1338 = vmatprep.subr.mxu0 0.0
    %1339 = vmatpush1.msra.mxu0 0.0
    %1340 = vmatprep.subr.mxu0 0.0
    %1341 = vmatpush1.msra.mxu0 0.0
    %1342 = vmatprep.subr.mxu0 0.0
    %1343 = vmatpush1.msra.mxu0 0.0
    %1344 = vmatprep.subr.mxu0 0.0
    %1345 = vmatpush1.msra.mxu0 0.0
    %1346 = vmatprep.subr.mxu0 0.0
    %1347 = vmatpush1.msra.mxu0 0.0
    %1348 = vmatprep.subr.mxu0 0.0
    %1349 = vmatpush1.msra.mxu0 0.0
    %1350 = vmatprep.subr.mxu0 0.0
    %1351 = vmatpush1.msra.mxu0 %v1313
    %1352 = vmatprep.subr.mxu0 0.0
    %1353 = vmatpush1.msra.mxu0 %v1312
    %1354 = vmatprep.subr.mxu0 0.0
    %1355 = vmatpush1.msra.mxu0 %v1311
    %1356 = vmatprep.subr.mxu0 0.0
    %1357 = vmatpush1.msra.mxu0 %v1310
    %1358 = vmatprep.subr.mxu0 0.0
    %1359 = vmatpush2.msra.mxu0 0.0
    %1360 = vmatprep.subr.mxu0 0.0
    %1361 = vmatpush2.msra.mxu0 0.0
    %1362 = vmatprep.subr.mxu0 0.0
    %1363 = vmatpush2.msra.mxu0 0.0
    %1364 = vmatprep.subr.mxu0 0.0
    %1365 = vmatpush2.msra.mxu0 0.0
    %1366 = vmatprep.subr.mxu0 0.0
    %1367 = vmatpush2.msra.mxu0 0.0
    %1368 = vmatprep.subr.mxu0 0.0
    %1369 = vmatpush2.msra.mxu0 0.0
    %1370 = vmatprep.subr.mxu0 0.0
    %1371 = vmatpush2.msra.mxu0 0.0
    %1372 = vmatprep.subr.mxu0 0.0
    %1373 = vmatpush2.msra.mxu0 0.0
    %1374 = vmatprep.subr.mxu0 0.0
    %1375 = vmatpush2.msra.mxu0 0.0
    %1376 = vmatprep.subr.mxu0 0.0
    %1377 = vmatpush2.msra.mxu0 0.0
    %1378 = vmatprep.subr.mxu0 0.0
    %1379 = vmatpush2.msra.mxu0 0.0
    %1380 = vmatprep.subr.mxu0 0.0
    %1381 = vmatpush2.msra.mxu0 0.0
    %1382 = vmatprep.subr.mxu0 0.0
    %1383 = vmatpush2.msra.mxu0 0.0
    %1384 = vmatprep.subr.mxu0 0.0
    %1385 = vmatpush2.msra.mxu0 0.0
    %1386 = vmatprep.subr.mxu0 0.0
    %1387 = vmatpush2.msra.mxu0 0.0
    %1388 = vmatprep.subr.mxu0 0.0
    %1389 = vmatpush2.msra.mxu0 0.0
    %1390 = vmatprep.mubr.f32.mxu0 0.0
    %1391 = vmatmul.mubr.f32.gmra.mxu0 %v1324
    %v1392 = vpop.f32.mrf.mxu0
    %v1393 = vadd.f32 %v1319, %v1392
    %v1394 = vpop.f32.mrf.mxu0
    %1395 = vdwg.mxu0
    %1396 = vst [vmem:[#allocation6] sm:$0xff] %v1393
    // Predicated region
    $region38: #{tpu_custom_call.1} parent=1 // pred_check
      _
    $region39: #{tpu_custom_call.1} parent=1 // pred_check_branch
      %1398 = sbr.rel (0) target = $region41
    $region40: #{tpu_custom_call.1} parent=1 // pred_region
      %s1400 = ssub.s32 128, 128
      %1401 = vsyncadd [#allocation5], %s1400
      %s1403 = sshll.u32 [#allocation6], 4
      %s1404 = int_to_ptr.vmem [resolvable:$true] %s1403
      %1406 = dma.vmem_to_hbm [thread:$0]  %s1404, 128, %s8, [#allocation5]
    $region41: #{tpu_custom_call.1} parent=1 // pred_fallthru
      _
    // Predicated region
    $region42: #{tpu_custom_call.1} parent=1 // pred_check
      _
    $region43: #{tpu_custom_call.1} parent=1 // pred_check_branch
      %1408 = sbr.rel (0) target = $region45
    $region44: #{tpu_custom_call.1} parent=1 // pred_region
      %1409 = dma.done [#allocation5], 128
    $region45: #{tpu_custom_call.1} parent=1 // pred_fallthru
      _
    %1410 = vsyncpa [#allocation4], 1
    %1411 = vsyncpa [#allocation5], 1

</llo_original>
